<compile_context>
chip_gen: v7x
topology: tpu7x:2x2x1
jax: 0.10.0
libtpu: 0.0.40
codegen_flags: <defaults>
</compile_context>

<pallas_src>
import functools

import numpy as np

import jax
import jax.numpy as jnp
from jax.experimental import pallas as pl
from jax.experimental.pallas import tpu as pltpu

NUM_FREQ = 8
IN_DIM = 3 + 3 * NUM_FREQ * 2  # 51


def _round_up(x, m):
    return ((x + m - 1) // m) * m


def _fourier_encoder_kernel(pts_ref, freqs_ref, wsin_ref, wcos_ref, wpts_ref, b_ref,
                            o_ref):
    """One grid step over tn points.

    pts_ref   : (3, tn)   f32  coords on sublanes, point index lane-dense
    freqs_ref : (8, 1)    f32  2**f column (input, not a captured constant)
    wsin_ref  : (3, H, 8) f32  wsin_ref[d][h, f] = W[h, 3  + d*8 + f]
    wcos_ref  : (3, H, 8) f32  wcos_ref[d][h, f] = W[h, 27 + d*8 + f]
    wpts_ref  : (H, 3)    f32  W[:, 0:3]
    b_ref     : (H, 1)    f32
    o_ref     : (tn, H)   f32  point-major output block (no wrapper transpose)
    """
    pts = pts_ref[...]                       # (3, tn)
    freqs = freqs_ref[...]                   # (8, 1)

    # Raw-coordinate passthrough + bias, accumulated feature-major on the MXU.
    acc = jnp.dot(wpts_ref[...], pts, preferred_element_type=jnp.float32) + b_ref[...]

    # Per-coordinate Fourier features.  Intermediates stay at (8, tn): fully
    # lane-dense for the VALU sin/cos polynomials (the binding unit), and there is
    # no (24, tn) proj / (51, tn) feat concatenation to materialize.
    for d in range(3):
        proj = pts[d:d + 1, :] * freqs                                   # (8, tn)
        acc = acc + jnp.dot(wsin_ref[d], jnp.sin(proj),
                            preferred_element_type=jnp.float32)          # (H, tn)
        acc = acc + jnp.dot(wcos_ref[d], jnp.cos(proj),
                            preferred_element_type=jnp.float32)

    # Single in-kernel transpose of the accumulator (XLU slack) so the output is
    # stored as a contiguous point-major (tn, H) block.
    o_ref[...] = acc.T


@functools.partial(jax.jit, static_argnames=("tile_n",))
def fourier_point_encoder(points, weight, bias, *, tile_n=8192):
    """points: (..., 3); weight: (H, 51) [PyTorch Linear layout]; bias: (H,)."""
    orig_shape = points.shape
    assert orig_shape[-1] == 3
    hidden = weight.shape[0]
    n = int(np.prod(orig_shape[:-1])) if len(orig_shape) > 1 else 1

    # ---- tile size: lane-aligned, hidden-aware VMEM budget, >= 2 grid steps ----
    # Conservative per-point bytes: double-buffered input (2*3*4) + double-buffered
    # output (2*H*4) + accumulator & its transpose (2*H*4) + proj/sin/cos temporaries
    # (<= 96*4 if all three coordinates stay live across the unrolled loop).
    bytes_per_point = 4 * (6 + 4 * hidden + 96)
    vmem_budget = 12 * 1024 * 1024       # under v5e's 16 MiB scoped default, v7x's 32 MiB
    tn = max(128, (min(int(tile_n), vmem_budget // bytes_per_point) // 128) * 128)

    n_ceil = _round_up(n, 128)
    tn = min(tn, n_ceil)
    if n_ceil >= 256:
        # Keep >= 2 grid steps so the "parallel" axis can shard across v7x's 2 TCs
        # (and so DMA/compute overlap exists even on single-TC parts).
        tn = min(tn, _round_up((n_ceil + 1) // 2, 128))

    n_pad = _round_up(n, tn)             # input padded so input blocks never clip
    grid = (n_pad // tn,)

    # ---- operand prep (cheap XLA layout plumbing) ----
    pts_t = points.reshape(n, 3).T.astype(jnp.float32)                    # (3, n)
    if n_pad != n:
        pts_t = jnp.pad(pts_t, ((0, 0), (0, n_pad - n)))                  # zero tail

    w = weight.astype(jnp.float32)                                        # (H, 51)
    wpts = w[:, 0:3]                                                      # (H, 3)
    wsin = w[:, 3:3 + 3 * NUM_FREQ].reshape(hidden, 3, NUM_FREQ).transpose(1, 0, 2)
    wcos = w[:, 3 + 3 * NUM_FREQ:IN_DIM].reshape(hidden, 3, NUM_FREQ).transpose(1, 0, 2)
    b2d = bias.reshape(hidden, 1).astype(jnp.float32)                     # (H, 1)
    freqs_col = (2.0 ** jnp.arange(NUM_FREQ, dtype=jnp.float32)).reshape(NUM_FREQ, 1)

    out = pl.pallas_call(
        _fourier_encoder_kernel,
        out_shape=jax.ShapeDtypeStruct((n, hidden), jnp.float32),
        grid_spec=pltpu.PrefetchScalarGridSpec(
            num_scalar_prefetch=0,
            grid=grid,
            in_specs=[
                pl.BlockSpec((3, tn), lambda i: (0, i)),                   # points
                pl.BlockSpec((NUM_FREQ, 1), lambda i: (0, 0)),             # 2**f
                pl.BlockSpec((3, hidden, NUM_FREQ), lambda i: (0, 0, 0)),  # W_sin
                pl.BlockSpec((3, hidden, NUM_FREQ), lambda i: (0, 0, 0)),  # W_cos
                pl.BlockSpec((hidden, 3), lambda i: (0, 0)),               # W_pts
                pl.BlockSpec((hidden, 1), lambda i: (0, 0)),               # bias
            ],
            # Point-major output; rows >= n of the last block are clipped by Pallas,
            # so no slice or transpose is needed in the wrapper.
            out_specs=pl.BlockSpec((tn, hidden), lambda i: (i, 0)),
        ),
        compiler_params=pltpu.CompilerParams(
            dimension_semantics=("parallel",)),
    )(pts_t, freqs_col, wsin, wcos, wpts, b2d)

    return out.reshape(*orig_shape[:-1], hidden)


def _reference(points, weight, bias):
    freqs = 2.0 ** jnp.arange(NUM_FREQ, dtype=jnp.float32)
    proj = points[..., :, None] * freqs                      # (..., 3, F)
    proj = proj.reshape(*points.shape[:-1], -1)              # (..., 3F)
    feat = jnp.concatenate([points, jnp.sin(proj), jnp.cos(proj)], axis=-1)
    return feat @ weight.T + bias


if __name__ == "__main__":
    hidden_size = 32
    batch, num_points = 2, 100   # deliberately not a multiple of the tile / 128

    key = jax.random.PRNGKey(0)
    k_pts, k_w, k_b = jax.random.split(key, 3)

    points = jax.random.normal(k_pts, (batch, num_points, 3), dtype=jnp.float32)
    # Deterministic "Linear(51, hidden)" parameters (PyTorch layout: (H, 51)).
    weight = jax.random.normal(k_w, (hidden_size, IN_DIM), dtype=jnp.float32) * 0.1
    bias = jax.random.normal(k_b, (hidden_size,), dtype=jnp.float32) * 0.1

    out = fourier_point_encoder(points, weight, bias)
    out = jax.block_until_ready(out)

    ref = _reference(points, weight, bias)
    assert out.shape == (batch, num_points, hidden_size)
    assert jnp.allclose(out, ref, atol=1e-4, rtol=1e-4), "mismatch vs reference"

    print("KERNEL_OK")
</pallas_src>

<mosaic_0001>
module attributes {stable_mosaic.version = 11 : i64} {
  func.func @_fourier_encoder_kernel(%arg0: i32, %arg1: memref<3x128xf32, #tpu.memory_space<vmem>>, %arg2: memref<8x1xf32, #tpu.memory_space<vmem>>, %arg3: memref<3x32x8xf32, #tpu.memory_space<vmem>>, %arg4: memref<3x32x8xf32, #tpu.memory_space<vmem>>, %arg5: memref<32x3xf32, #tpu.memory_space<vmem>>, %arg6: memref<32x1xf32, #tpu.memory_space<vmem>>, %arg7: memref<128x32xf32, #tpu.memory_space<vmem>>) attributes {dimension_semantics = [#tpu.dimension_semantics<parallel>], iteration_bounds = array<i64: 2>, scalar_prefetch = 0 : i64, scratch_operands = 0 : i64, tpu.core_type = #tpu.core_type<tc>, window_params = [{transform_indices = @transform_0, window_bounds = array<i64: 3, 128>}, {pipeline_mode = #tpu.pipeline_mode<synchronous>, transform_indices = @transform_1, window_bounds = array<i64: 8, 1>}, {pipeline_mode = #tpu.pipeline_mode<synchronous>, transform_indices = @transform_2, window_bounds = array<i64: 3, 32, 8>}, {pipeline_mode = #tpu.pipeline_mode<synchronous>, transform_indices = @transform_3, window_bounds = array<i64: 3, 32, 8>}, {pipeline_mode = #tpu.pipeline_mode<synchronous>, transform_indices = @transform_4, window_bounds = array<i64: 32, 3>}, {pipeline_mode = #tpu.pipeline_mode<synchronous>, transform_indices = @transform_5, window_bounds = array<i64: 32, 1>}, {transform_indices = @transform_6, window_bounds = array<i64: 128, 32>}]} {
    %c0 = arith.constant 0 : index
    %c0_0 = arith.constant 0 : index
    %0 = vector.load %arg1[%c0, %c0_0] : memref<3x128xf32, #tpu.memory_space<vmem>>, vector<3x128xf32>
    %c0_1 = arith.constant 0 : index
    %c0_2 = arith.constant 0 : index
    %1 = vector.load %arg2[%c0_1, %c0_2] : memref<8x1xf32, #tpu.memory_space<vmem>>, vector<8x1xf32>
    %c0_3 = arith.constant 0 : index
    %c0_4 = arith.constant 0 : index
    %2 = vector.load %arg5[%c0_3, %c0_4] : memref<32x3xf32, #tpu.memory_space<vmem>>, vector<32x3xf32>
    %cst = arith.constant dense<0.000000e+00> : vector<32x128xf32>
    %3 = tpu.matmul %2, %0, %cst {dimension_numbers = #tpu.dot_dimension_numbers<[1], [0], [0], [1], [0, 0, 1, 1], [], []>} : vector<32x3xf32>, vector<3x128xf32>, vector<32x128xf32> -> vector<32x128xf32>
    %c0_5 = arith.constant 0 : index
    %c0_6 = arith.constant 0 : index
    %4 = vector.load %arg6[%c0_5, %c0_6] : memref<32x1xf32, #tpu.memory_space<vmem>>, vector<32x1xf32>
    %5 = vector.broadcast %4 : vector<32x1xf32> to vector<32x128xf32>
    %6 = arith.addf %3, %5 : vector<32x128xf32>
    %7 = vector.extract_strided_slice %0 {offsets = [0, 0], sizes = [1, 128], strides = [1, 1]} : vector<3x128xf32> to vector<1x128xf32>
    %8 = vector.broadcast %7 : vector<1x128xf32> to vector<8x128xf32>
    %9 = vector.broadcast %1 : vector<8x1xf32> to vector<8x128xf32>
    %10 = arith.mulf %8, %9 : vector<8x128xf32>
    %c0_7 = arith.constant 0 : index
    %c0_8 = arith.constant 0 : index
    %c0_9 = arith.constant 0 : index
    %11 = vector.load %arg3[%c0_7, %c0_8, %c0_9] : memref<3x32x8xf32, #tpu.memory_space<vmem>>, vector<1x32x8xf32>
    %12 = vector.shape_cast %11 : vector<1x32x8xf32> to vector<32x8xf32>
    %13 = math.sin %10 : vector<8x128xf32>
    %cst_10 = arith.constant dense<0.000000e+00> : vector<32x128xf32>
    %14 = tpu.matmul %12, %13, %cst_10 {dimension_numbers = #tpu.dot_dimension_numbers<[1], [0], [0], [1], [0, 0, 1, 1], [], []>} : vector<32x8xf32>, vector<8x128xf32>, vector<32x128xf32> -> vector<32x128xf32>
    %15 = arith.addf %6, %14 : vector<32x128xf32>
    %c0_11 = arith.constant 0 : index
    %c0_12 = arith.constant 0 : index
    %c0_13 = arith.constant 0 : index
    %16 = vector.load %arg4[%c0_11, %c0_12, %c0_13] : memref<3x32x8xf32, #tpu.memory_space<vmem>>, vector<1x32x8xf32>
    %17 = vector.shape_cast %16 : vector<1x32x8xf32> to vector<32x8xf32>
    %18 = math.cos %10 : vector<8x128xf32>
    %cst_14 = arith.constant dense<0.000000e+00> : vector<32x128xf32>
    %19 = tpu.matmul %17, %18, %cst_14 {dimension_numbers = #tpu.dot_dimension_numbers<[1], [0], [0], [1], [0, 0, 1, 1], [], []>} : vector<32x8xf32>, vector<8x128xf32>, vector<32x128xf32> -> vector<32x128xf32>
    %20 = arith.addf %15, %19 : vector<32x128xf32>
    %21 = vector.extract_strided_slice %0 {offsets = [1, 0], sizes = [1, 128], strides = [1, 1]} : vector<3x128xf32> to vector<1x128xf32>
    %22 = vector.broadcast %21 : vector<1x128xf32> to vector<8x128xf32>
    %23 = vector.broadcast %1 : vector<8x1xf32> to vector<8x128xf32>
    %24 = arith.mulf %22, %23 : vector<8x128xf32>
    %c1 = arith.constant 1 : index
    %c0_15 = arith.constant 0 : index
    %c0_16 = arith.constant 0 : index
    %25 = vector.load %arg3[%c1, %c0_15, %c0_16] : memref<3x32x8xf32, #tpu.memory_space<vmem>>, vector<1x32x8xf32>
    %26 = vector.shape_cast %25 : vector<1x32x8xf32> to vector<32x8xf32>
    %27 = math.sin %24 : vector<8x128xf32>
    %cst_17 = arith.constant dense<0.000000e+00> : vector<32x128xf32>
    %28 = tpu.matmul %26, %27, %cst_17 {dimension_numbers = #tpu.dot_dimension_numbers<[1], [0], [0], [1], [0, 0, 1, 1], [], []>} : vector<32x8xf32>, vector<8x128xf32>, vector<32x128xf32> -> vector<32x128xf32>
    %29 = arith.addf %20, %28 : vector<32x128xf32>
    %c1_18 = arith.constant 1 : index
    %c0_19 = arith.constant 0 : index
    %c0_20 = arith.constant 0 : index
    %30 = vector.load %arg4[%c1_18, %c0_19, %c0_20] : memref<3x32x8xf32, #tpu.memory_space<vmem>>, vector<1x32x8xf32>
    %31 = vector.shape_cast %30 : vector<1x32x8xf32> to vector<32x8xf32>
    %32 = math.cos %24 : vector<8x128xf32>
    %cst_21 = arith.constant dense<0.000000e+00> : vector<32x128xf32>
    %33 = tpu.matmul %31, %32, %cst_21 {dimension_numbers = #tpu.dot_dimension_numbers<[1], [0], [0], [1], [0, 0, 1, 1], [], []>} : vector<32x8xf32>, vector<8x128xf32>, vector<32x128xf32> -> vector<32x128xf32>
    %34 = arith.addf %29, %33 : vector<32x128xf32>
    %35 = vector.extract_strided_slice %0 {offsets = [2, 0], sizes = [1, 128], strides = [1, 1]} : vector<3x128xf32> to vector<1x128xf32>
    %36 = vector.broadcast %35 : vector<1x128xf32> to vector<8x128xf32>
    %37 = vector.broadcast %1 : vector<8x1xf32> to vector<8x128xf32>
    %38 = arith.mulf %36, %37 : vector<8x128xf32>
    %c2 = arith.constant 2 : index
    %c0_22 = arith.constant 0 : index
    %c0_23 = arith.constant 0 : index
    %39 = vector.load %arg3[%c2, %c0_22, %c0_23] : memref<3x32x8xf32, #tpu.memory_space<vmem>>, vector<1x32x8xf32>
    %40 = vector.shape_cast %39 : vector<1x32x8xf32> to vector<32x8xf32>
    %41 = math.sin %38 : vector<8x128xf32>
    %cst_24 = arith.constant dense<0.000000e+00> : vector<32x128xf32>
    %42 = tpu.matmul %40, %41, %cst_24 {dimension_numbers = #tpu.dot_dimension_numbers<[1], [0], [0], [1], [0, 0, 1, 1], [], []>} : vector<32x8xf32>, vector<8x128xf32>, vector<32x128xf32> -> vector<32x128xf32>
    %43 = arith.addf %34, %42 : vector<32x128xf32>
    %c2_25 = arith.constant 2 : index
    %c0_26 = arith.constant 0 : index
    %c0_27 = arith.constant 0 : index
    %44 = vector.load %arg4[%c2_25, %c0_26, %c0_27] : memref<3x32x8xf32, #tpu.memory_space<vmem>>, vector<1x32x8xf32>
    %45 = vector.shape_cast %44 : vector<1x32x8xf32> to vector<32x8xf32>
    %46 = math.cos %38 : vector<8x128xf32>
    %cst_28 = arith.constant dense<0.000000e+00> : vector<32x128xf32>
    %47 = tpu.matmul %45, %46, %cst_28 {dimension_numbers = #tpu.dot_dimension_numbers<[1], [0], [0], [1], [0, 0, 1, 1], [], []>} : vector<32x8xf32>, vector<8x128xf32>, vector<32x128xf32> -> vector<32x128xf32>
    %48 = arith.addf %43, %47 : vector<32x128xf32>
    %49 = tpu.transpose %48, [1, 0] : vector<32x128xf32> -> vector<128x32xf32>
    %c0_29 = arith.constant 0 : index
    %c0_30 = arith.constant 0 : index
    %50 = vector.load %arg7[%c0_29, %c0_30] : memref<128x32xf32, #tpu.memory_space<vmem>>, vector<128x32xf32>
    tpu.vector_store %arg7[%c0_29, %c0_30], %49 {strides = array<i32>} : memref<128x32xf32, #tpu.memory_space<vmem>>, vector<128x32xf32>,
    return
  }
  func.func @transform_0(%arg0: i32) -> (i32, i32) {
    %c0_i32 = arith.constant 0 : i32
    %c0_i32_0 = arith.constant 0 : i32
    return %c0_i32, %arg0 : i32, i32
  }
  func.func @transform_1(%arg0: i32) -> (i32, i32) {
    %c0_i32 = arith.constant 0 : i32
    %c0_i32_0 = arith.constant 0 : i32
    %c0_i32_1 = arith.constant 0 : i32
    return %c0_i32, %c0_i32_0 : i32, i32
  }
  func.func @transform_2(%arg0: i32) -> (i32, i32, i32) {
    %c0_i32 = arith.constant 0 : i32
    %c0_i32_0 = arith.constant 0 : i32
    %c0_i32_1 = arith.constant 0 : i32
    %c0_i32_2 = arith.constant 0 : i32
    return %c0_i32, %c0_i32_0, %c0_i32_1 : i32, i32, i32
  }
  func.func @transform_3(%arg0: i32) -> (i32, i32, i32) {
    %c0_i32 = arith.constant 0 : i32
    %c0_i32_0 = arith.constant 0 : i32
    %c0_i32_1 = arith.constant 0 : i32
    %c0_i32_2 = arith.constant 0 : i32
    return %c0_i32, %c0_i32_0, %c0_i32_1 : i32, i32, i32
  }
  func.func @transform_4(%arg0: i32) -> (i32, i32) {
    %c0_i32 = arith.constant 0 : i32
    %c0_i32_0 = arith.constant 0 : i32
    %c0_i32_1 = arith.constant 0 : i32
    return %c0_i32, %c0_i32_0 : i32, i32
  }
  func.func @transform_5(%arg0: i32) -> (i32, i32) {
    %c0_i32 = arith.constant 0 : i32
    %c0_i32_0 = arith.constant 0 : i32
    %c0_i32_1 = arith.constant 0 : i32
    return %c0_i32, %c0_i32_0 : i32, i32
  }
  func.func @transform_6(%arg0: i32) -> (i32, i32) {
    %c0_i32 = arith.constant 0 : i32
    %c0_i32_0 = arith.constant 0 : i32
    return %arg0, %c0_i32 : i32, i32
  }
}

</mosaic_0001>

<llo_original>
// kernel: fourier_point_encoder.1
$region0: #{fourier_point_encoder.1}
  #allocation0 [shape = 'u32[]', space=smem, size = 0x4, offset = 0x4, fixed_abs, tag = 'smem constant byte address 0x4 - core index']
  #allocation1 [shape = 'u32[144,128]{1,0:T(1,128)}', space=vmem, size = 0x12000, scoped, tag = 'internal scratch']
  %s0 = inlined_call_operand.vmem [shape: f32[3,256], index: 0, kind: input, shape index: {}]
  %s1 = inlined_call_operand.vmem [shape: f32[8,1], index: 1, kind: input, shape index: {}]
  %s2 = inlined_call_operand.vmem [shape: f32[3,32,8], index: 2, kind: input, shape index: {}]
  %s3 = inlined_call_operand.vmem [shape: f32[3,32,8], index: 3, kind: input, shape index: {}]
  %s4 = inlined_call_operand.vmem [shape: f32[32,3], index: 4, kind: input, shape index: {}]
  %s5 = inlined_call_operand.vmem [shape: f32[32,1], index: 5, kind: input, shape index: {}]
  %s6 = inlined_call_operand.vmem [shape: f32[200,32], index: 6, kind: output, shape index: {}]
  %s7 = sld [smem:[#allocation0]]
  $region105: #{fourier_point_encoder.1} parent=0
    _
  %s9 = ssub.s32 1, %s7
  %s10 = scalar_select 0, %s9, %s7
  $region1: #{fourier_point_encoder.1} parent=0
    #allocation2 [shape = 'u8[131072]{0}', space=vmem, size = 0x20000, scoped, tag = 'output window, operand 0']
    loop: start=0, step=1, limit=4
    $region2: #{fourier_point_encoder.1} parent=1 // loop_pre_header
      _
    $region3: #{fourier_point_encoder.1} parent=1 // loop_header
      %s12 = sphi 0, %s16
      %p13 = scmp.ge.s32.totalorder %s12, 4
      %s22 = sphi 0, %s24
      %s25 = sphi 0, %s22
      %s26 = sphi 0, %s25
      %s42 = sphi 0, %s26
      %s46 = sphi 0, %s46
      %s48 = sphi 0, %s46
      %s49 = sphi 0, %s48
      %s63 = sphi 0, %s49
      %s67 = sphi 0, %s67
      %s69 = sphi 0, %s67
      %s70 = sphi 0, %s69
      %s84 = sphi 0, %s70
      %s88 = sphi 0, %s88
      %s90 = sphi 0, %s88
      %s91 = sphi 0, %s90
      %s105 = sphi 0, %s91
      %s109 = sphi 0, %s109
      %s111 = sphi 0, %s109
      %s112 = sphi 0, %s111
      %s126 = sphi 0, %s112
      %s130 = sphi 0, %s130
      %s132 = sphi 0, %s130
      %s133 = sphi 0, %s132
      %s147 = sphi 0, %s133
      %s153 = sphi 0, %s155
      %s156 = sphi 0, %s153
      %s157 = sphi 0, %s156
      %s173 = sphi 0, %s157
    $region4: #{fourier_point_encoder.1} parent=1 // loop_header_branch
      %15 = sbr.rel (%p13) target = $region8
    $region5: #{fourier_point_encoder.1} parent=1 // loop_body
      %s17 = ssub.s32 %s12, 1
      %s18 = ssub.s32 %s12, 2
      %s19 = sadd.s32 %s12, 1
      %s20 = ssub.s32 %s12, %s19
      %p21 = scmp.eq.s32.totalorder %s20, 0
      %s23 = sadd.s32 %s22, 1
      %s24 = scalar_select %p21, %s22, %s23
      %p27 = pneg %p21
      %p28 = scmp.eq.s32.totalorder %s12, 1
      %p29 = por %p27, %p28
      %p30 = scmp.ne.s32.totalorder %s22, %s25
      %p31 = scmp.eq.s32.totalorder %s12, 0
      %p32 = por %p30, %p31
      %p33 = scmp.ne.s32.totalorder %s22, %s25
      %p34 = scmp.eq.s32.totalorder %s17, 1
      %p35 = por %p33, %p34
      %p36 = scmp.ne.s32.totalorder %s25, %s26
      %p37 = scmp.eq.s32.totalorder %s17, 0
      %p38 = por %p36, %p37
      %p39 = scmp.ne.s32.totalorder %s25, %s26
      %p40 = scmp.eq.s32.totalorder %s18, 1
      %p41 = por %p39, %p40
      %p43 = scmp.ne.s32.totalorder %s26, %s42
      %p44 = scmp.eq.s32.totalorder %s18, 0
      %p45 = por %p43, %p44
      %s47 = sadd.s32 %s46, 1
      %p50 = scmp.eq.s32.totalorder %s12, 1
      %p51 = scmp.ne.s32.totalorder %s46, %s48
      %p52 = scmp.eq.s32.totalorder %s12, 0
      %p53 = por %p51, %p52
      %p54 = scmp.ne.s32.totalorder %s46, %s48
      %p55 = scmp.eq.s32.totalorder %s17, 1
      %p56 = por %p54, %p55
      %p57 = scmp.ne.s32.totalorder %s48, %s49
      %p58 = scmp.eq.s32.totalorder %s17, 0
      %p59 = por %p57, %p58
      %p60 = scmp.ne.s32.totalorder %s48, %s49
      %p61 = scmp.eq.s32.totalorder %s18, 1
      %p62 = por %p60, %p61
      %p64 = scmp.ne.s32.totalorder %s49, %s63
      %p65 = scmp.eq.s32.totalorder %s18, 0
      %p66 = por %p64, %p65
      %s68 = sadd.s32 %s67, 1
      %p71 = scmp.eq.s32.totalorder %s12, 1
      %p72 = scmp.ne.s32.totalorder %s67, %s69
      %p73 = scmp.eq.s32.totalorder %s12, 0
      %p74 = por %p72, %p73
      %p75 = scmp.ne.s32.totalorder %s67, %s69
      %p76 = scmp.eq.s32.totalorder %s17, 1
      %p77 = por %p75, %p76
      %p78 = scmp.ne.s32.totalorder %s69, %s70
      %p79 = scmp.eq.s32.totalorder %s17, 0
      %p80 = por %p78, %p79
      %p81 = scmp.ne.s32.totalorder %s69, %s70
      %p82 = scmp.eq.s32.totalorder %s18, 1
      %p83 = por %p81, %p82
      %p85 = scmp.ne.s32.totalorder %s70, %s84
      %p86 = scmp.eq.s32.totalorder %s18, 0
      %p87 = por %p85, %p86
      %s89 = sadd.s32 %s88, 1
      %p92 = scmp.eq.s32.totalorder %s12, 1
      %p93 = scmp.ne.s32.totalorder %s88, %s90
      %p94 = scmp.eq.s32.totalorder %s12, 0
      %p95 = por %p93, %p94
      %p96 = scmp.ne.s32.totalorder %s88, %s90
      %p97 = scmp.eq.s32.totalorder %s17, 1
      %p98 = por %p96, %p97
      %p99 = scmp.ne.s32.totalorder %s90, %s91
      %p100 = scmp.eq.s32.totalorder %s17, 0
      %p101 = por %p99, %p100
      %p102 = scmp.ne.s32.totalorder %s90, %s91
      %p103 = scmp.eq.s32.totalorder %s18, 1
      %p104 = por %p102, %p103
      %p106 = scmp.ne.s32.totalorder %s91, %s105
      %p107 = scmp.eq.s32.totalorder %s18, 0
      %p108 = por %p106, %p107
      %s110 = sadd.s32 %s109, 1
      %p113 = scmp.eq.s32.totalorder %s12, 1
      %p114 = scmp.ne.s32.totalorder %s109, %s111
      %p115 = scmp.eq.s32.totalorder %s12, 0
      %p116 = por %p114, %p115
      %p117 = scmp.ne.s32.totalorder %s109, %s111
      %p118 = scmp.eq.s32.totalorder %s17, 1
      %p119 = por %p117, %p118
      %p120 = scmp.ne.s32.totalorder %s111, %s112
      %p121 = scmp.eq.s32.totalorder %s17, 0
      %p122 = por %p120, %p121
      %p123 = scmp.ne.s32.totalorder %s111, %s112
      %p124 = scmp.eq.s32.totalorder %s18, 1
      %p125 = por %p123, %p124
      %p127 = scmp.ne.s32.totalorder %s112, %s126
      %p128 = scmp.eq.s32.totalorder %s18, 0
      %p129 = por %p127, %p128
      %s131 = sadd.s32 %s130, 1
      %p134 = scmp.eq.s32.totalorder %s12, 1
      %p135 = scmp.ne.s32.totalorder %s130, %s132
      %p136 = scmp.eq.s32.totalorder %s12, 0
      %p137 = por %p135, %p136
      %p138 = scmp.ne.s32.totalorder %s130, %s132
      %p139 = scmp.eq.s32.totalorder %s17, 1
      %p140 = por %p138, %p139
      %p141 = scmp.ne.s32.totalorder %s132, %s133
      %p142 = scmp.eq.s32.totalorder %s17, 0
      %p143 = por %p141, %p142
      %p144 = scmp.ne.s32.totalorder %s132, %s133
      %p145 = scmp.eq.s32.totalorder %s18, 1
      %p146 = por %p144, %p145
      %p148 = scmp.ne.s32.totalorder %s133, %s147
      %p149 = scmp.eq.s32.totalorder %s18, 0
      %p150 = por %p148, %p149
      %s151 = ssub.s32 %s12, %s19
      %p152 = scmp.eq.s32.totalorder %s151, 0
      %s154 = sadd.s32 %s153, 1
      %s155 = scalar_select %p152, %s153, %s154
      %p158 = pneg %p152
      %p159 = scmp.eq.s32.totalorder %s12, 1
      %p160 = por %p158, %p159
      %p161 = scmp.ne.s32.totalorder %s153, %s156
      %p162 = scmp.eq.s32.totalorder %s12, 0
      %p163 = por %p161, %p162
      %p164 = scmp.ne.s32.totalorder %s153, %s156
      %p165 = scmp.eq.s32.totalorder %s17, 1
      %p166 = por %p164, %p165
      %p167 = scmp.ne.s32.totalorder %s156, %s157
      %p168 = scmp.eq.s32.totalorder %s17, 0
      %p169 = por %p167, %p168
      %p170 = scmp.ne.s32.totalorder %s156, %s157
      %p171 = scmp.eq.s32.totalorder %s18, 1
      %p172 = por %p170, %p171
      %p174 = scmp.ne.s32.totalorder %s157, %s173
      %p175 = scmp.eq.s32.totalorder %s18, 0
      %p176 = por %p174, %p175
      %p177 = scmp.le.s32.totalorder 1, %s12
      %p178 = scmp.lt.s32.totalorder %s12, 3
      %p179 = pnand %p177, %p178
      %p180 = pneg %p179
      // Predicated region
      $region9: #{fourier_point_encoder.1} parent=5 // pred_check
        _
      $region10: #{fourier_point_encoder.1} parent=5 // pred_check_branch
        %182 = sbr.rel (%p179) target = $region12
      $region11: #{fourier_point_encoder.1} parent=5 // pred_region
        %s183 = ssub.s32 %s12, 1
        // Predicated region
        $region13: #{fourier_point_encoder.1} parent=11 // pred_check
          %p184 = pneg %p59
        $region14: #{fourier_point_encoder.1} parent=11 // pred_check_branch
          %186 = sbr.rel (%p184) target = $region16
        $region15: #{fourier_point_encoder.1} parent=11 // pred_region
          _
        $region16: #{fourier_point_encoder.1} parent=11 // pred_fallthru
          _
        // Predicated region
        $region17: #{fourier_point_encoder.1} parent=11 // pred_check
          %p187 = pneg %p80
        $region18: #{fourier_point_encoder.1} parent=11 // pred_check_branch
          %189 = sbr.rel (%p187) target = $region20
        $region19: #{fourier_point_encoder.1} parent=11 // pred_region
          _
        $region20: #{fourier_point_encoder.1} parent=11 // pred_fallthru
          _
        // Predicated region
        $region21: #{fourier_point_encoder.1} parent=11 // pred_check
          %p190 = pneg %p101
        $region22: #{fourier_point_encoder.1} parent=11 // pred_check_branch
          %192 = sbr.rel (%p190) target = $region24
        $region23: #{fourier_point_encoder.1} parent=11 // pred_region
          _
        $region24: #{fourier_point_encoder.1} parent=11 // pred_fallthru
          _
        // Predicated region
        $region25: #{fourier_point_encoder.1} parent=11 // pred_check
          %p193 = pneg %p122
        $region26: #{fourier_point_encoder.1} parent=11 // pred_check_branch
          %195 = sbr.rel (%p193) target = $region28
        $region27: #{fourier_point_encoder.1} parent=11 // pred_region
          _
        $region28: #{fourier_point_encoder.1} parent=11 // pred_fallthru
          _
        // Predicated region
        $region29: #{fourier_point_encoder.1} parent=11 // pred_check
          %p196 = pneg %p143
        $region30: #{fourier_point_encoder.1} parent=11 // pred_check_branch
          %198 = sbr.rel (%p196) target = $region32
        $region31: #{fourier_point_encoder.1} parent=11 // pred_region
          _
        $region32: #{fourier_point_encoder.1} parent=11 // pred_fallthru
          _
      $region12: #{fourier_point_encoder.1} parent=5 // pred_fallthru
        _
      %p199 = scmp.lt.s32.totalorder %s12, 2
      // Predicated region
      $region33: #{fourier_point_encoder.1} parent=5 // pred_check
        %p200 = pneg %p199
      $region34: #{fourier_point_encoder.1} parent=5 // pred_check_branch
        %202 = sbr.rel (%p200) target = $region36
      $region35: #{fourier_point_encoder.1} parent=5 // pred_region
        // Predicated region
        $region37: #{fourier_point_encoder.1} parent=35 // pred_check
          %p203 = pneg %p32
        $region38: #{fourier_point_encoder.1} parent=35 // pred_check_branch
          %205 = sbr.rel (%p203) target = $region40
        $region39: #{fourier_point_encoder.1} parent=35 // pred_region
          %p206 = scmp.lt.s32.totalorder %s12, 1
          %s207 = scalar_select %p206, %s12, 1
          %s208 = smul.addr %s207, 4
          %s209 = scalar_lea.vmem %s0, %s208
        $region40: #{fourier_point_encoder.1} parent=35 // pred_fallthru
          _
      $region36: #{fourier_point_encoder.1} parent=5 // pred_fallthru
        _
      %p210 = scmp.le.s32.totalorder 1, %s12
      %p211 = scmp.lt.s32.totalorder %s12, 3
      %p212 = pnand %p210, %p211
      %p213 = pneg %p212
      // Predicated region
      $region41: #{fourier_point_encoder.1} parent=5 // pred_check
        _
      $region42: #{fourier_point_encoder.1} parent=5 // pred_check_branch
        %215 = sbr.rel (%p212) target = $region44
      $region43: #{fourier_point_encoder.1} parent=5 // pred_region
        %s216 = ssub.s32 %s12, 1
        %p217 = scmp.lt.s32.totalorder %s17, 1
        %s218 = scalar_select %p217, %s17, 1
        %s219 = smul.addr %s218, 4
        %s220 = scalar_lea.vmem %s0, %s219
        %p221 = pneg %p38
        %p222 = pneg %p35
        %p223 = pneg %p59
        %p224 = pneg %p56
        %p225 = pneg %p80
        %p226 = pneg %p77
        %p227 = pneg %p101
        %p228 = pneg %p98
        %p229 = pneg %p122
        %p230 = pneg %p119
        %p231 = pneg %p143
        %p232 = pneg %p140
        %p233 = pneg %p169
        %p234 = pneg %p166
        %s235 = sand.u32 %s156, 1
        %s236 = sand.u32 %s156, 1
        %s237 = smul.addr %s236, 128
        %s238 = scalar_lea.vmem [#allocation2], %s237
        %p239 = scmp.lt.s32.totalorder %s17, 1
        %s240 = scalar_select %p239, %s17, 1
        %s241 = smul.addr %s240, 4
        %s242 = scalar_lea.vmem %s0, %s241
        %s243 = smul.u32 16, %s17
        %s244 = ssub.s32 25, %s243
        %p245 = scmp.lt.s32.totalorder %s244, 16
        %s246 = scalar_select %p245, %s244, 16
        %s247 = smul.u32 128, %s246
        %v248 = vld [vmem:[%s242] sm:$0x7]
        %v249 = vld [vmem:[%s1] sm:$0xff]
        %v250 = vld [vmem:[%s4] sm:$0xff]
        %v251 = vld [vmem:[%s4 + $0x8] sm:$0xff]
        %v252 = vld [vmem:[%s4 + $0x10] sm:$0xff]
        %v253 = vld [vmem:[%s4 + $0x18] sm:$0xff]
        %v254 = vld [vmem:[%s5] sm:$0xff]
        %v255 = vld [vmem:[%s5 + $0x8] sm:$0xff]
        %v256 = vld [vmem:[%s5 + $0x10] sm:$0xff]
        %v257 = vld [vmem:[%s5 + $0x18] sm:$0xff]
        %259 = vset.pattern.permute.xlu0 0
        %260 = vperm.xlu0 %259, %v254
        %v261 = vpop.permute.xlu0 %260
        %264 = vset.pattern.permute.xlu0 0
        %265 = vperm.xlu0 %264, %v255
        %v266 = vpop.permute.xlu0 %265
        %269 = vset.pattern.permute.xlu0 0
        %270 = vperm.xlu0 %269, %v256
        %v271 = vpop.permute.xlu0 %270
        %274 = vset.pattern.permute.xlu0 0
        %275 = vperm.xlu0 %274, %v257
        %v276 = vpop.permute.xlu0 %275
        %vm278 = vcmask 23552
        %v280 = vsel %vm278, %v250, 0
        %v283 = vsel %vm278, %v251, 0
        %v286 = vsel %vm278, %v252, 0
        %v289 = vsel %vm278, %v253, 0
        %vm291 = vcmask 1042432
        %v293 = vsel %vm291, %v248, 0
        %295 = vmatprep.subr.mxu0 0.0
        %296 = vmatpush1.msra.mxu0 %v293
        %297 = vmatprep.subr.mxu0 0.0
        %298 = vmatpush1.msra.mxu0 0.0
        %299 = vmatprep.subr.mxu0 0.0
        %300 = vmatpush1.msra.mxu0 0.0
        %301 = vmatprep.subr.mxu0 0.0
        %302 = vmatpush1.msra.mxu0 0.0
        %303 = vmatprep.subr.mxu0 0.0
        %304 = vmatpush1.msra.mxu0 0.0
        %305 = vmatprep.subr.mxu0 0.0
        %306 = vmatpush1.msra.mxu0 0.0
        %307 = vmatprep.subr.mxu0 0.0
        %308 = vmatpush1.msra.mxu0 0.0
        %309 = vmatprep.subr.mxu0 0.0
        %310 = vmatpush1.msra.mxu0 0.0
        %311 = vmatprep.subr.mxu0 0.0
        %312 = vmatpush1.msra.mxu0 0.0
        %313 = vmatprep.subr.mxu0 0.0
        %314 = vmatpush1.msra.mxu0 0.0
        %315 = vmatprep.subr.mxu0 0.0
        %316 = vmatpush1.msra.mxu0 0.0
        %317 = vmatprep.subr.mxu0 0.0
        %318 = vmatpush1.msra.mxu0 0.0
        %319 = vmatprep.subr.mxu0 0.0
        %320 = vmatpush1.msra.mxu0 0.0
        %321 = vmatprep.subr.mxu0 0.0
        %322 = vmatpush1.msra.mxu0 0.0
        %323 = vmatprep.subr.mxu0 0.0
        %324 = vmatpush1.msra.mxu0 0.0
        %325 = vmatprep.subr.mxu0 0.0
        %326 = vmatpush1.msra.mxu0 0.0
        %327 = vmatprep.subr.mxu0 0.0
        %328 = vmatpush1.msra.mxu0 0.0
        %329 = vmatprep.subr.mxu0 0.0
        %330 = vmatpush1.msra.mxu0 0.0
        %331 = vmatprep.subr.mxu0 0.0
        %332 = vmatpush1.msra.mxu0 0.0
        %333 = vmatprep.subr.mxu0 0.0
        %334 = vmatpush1.msra.mxu0 0.0
        %335 = vmatprep.subr.mxu0 0.0
        %336 = vmatpush1.msra.mxu0 0.0
        %337 = vmatprep.subr.mxu0 0.0
        %338 = vmatpush1.msra.mxu0 0.0
        %339 = vmatprep.subr.mxu0 0.0
        %340 = vmatpush1.msra.mxu0 0.0
        %341 = vmatprep.subr.mxu0 0.0
        %342 = vmatpush1.msra.mxu0 0.0
        %343 = vmatprep.subr.mxu0 0.0
        %344 = vmatpush1.msra.mxu0 0.0
        %345 = vmatprep.subr.mxu0 0.0
        %346 = vmatpush1.msra.mxu0 0.0
        %347 = vmatprep.subr.mxu0 0.0
        %348 = vmatpush1.msra.mxu0 0.0
        %349 = vmatprep.subr.mxu0 0.0
        %350 = vmatpush1.msra.mxu0 0.0
        %351 = vmatprep.subr.mxu0 0.0
        %352 = vmatpush1.msra.mxu0 0.0
        %353 = vmatprep.subr.mxu0 0.0
        %354 = vmatpush1.msra.mxu0 0.0
        %355 = vmatprep.subr.mxu0 0.0
        %356 = vmatpush1.msra.mxu0 0.0
        %357 = vmatprep.subr.mxu0 0.0
        %358 = vmatpush1.msra.mxu0 0.0
        %359 = vmatprep.mubr.f32.mxu0 0.0
        %360 = vmatmul.mubr.f32.gmra.mrb[0].mxu0 %v280
        %v361 = vpop.f32.mrb[0].mxu0
        %v362 = vadd.f32 %v261, %v361
        %v363 = vpop.f32.mrb[0].mxu0
        %364 = vmatprep.mubr.f32.mxu0 0.0
        %365 = vmatmul.mubr.f32.gmra.mrb[0].mxu0 %v283
        %v366 = vpop.f32.mrb[0].mxu0
        %v367 = vadd.f32 %v266, %v366
        %v368 = vpop.f32.mrb[0].mxu0
        %369 = vmatprep.mubr.f32.mxu0 0.0
        %370 = vmatmul.mubr.f32.gmra.mrb[0].mxu0 %v286
        %v371 = vpop.f32.mrb[0].mxu0
        %v372 = vadd.f32 %v271, %v371
        %v373 = vpop.f32.mrb[0].mxu0
        %374 = vmatprep.mubr.f32.mxu0 0.0
        %375 = vmatmul.mubr.f32.gmra.mrb[0].mxu0 %v289
        %v376 = vpop.f32.mrb[0].mxu0
        %v377 = vadd.f32 %v276, %v376
        %v378 = vpop.f32.mrb[0].mxu0
        %379 = vdwg.mxu0
        %v380 = vlaneseq
        %v381 = vshrl.u32 %v380, 7
        %v382 = vsub.s32 0, %v381
        %v383 = vrot.slane %v248, %v382
        %385 = vset.pattern.permute.xlu0 0
        %386 = vperm.xlu0 %385, %v249
        %v387 = vpop.permute.xlu0 %386
        %v389 = vmul.f32 %v383, %v387
        %v390 = vld [vmem:[%s2] sm:$0xff]
        %v391 = vld [vmem:[%s2 + $0x8] sm:$0xff]
        %v392 = vld [vmem:[%s2 + $0x10] sm:$0xff]
        %v393 = vld [vmem:[%s2 + $0x18] sm:$0xff]
        %v394 = vand.u32 2147483647, %v389
        %vm395 = vcmp.le.f32.partialorder %v394, 0.7853982
        %vm396 = vcmp.lt.s32.totalorder %v389, 0
        %v397 = vand.u32 %v389, 2139095040
        %v398 = vshrl.u32 %v397, 23
        %v399 = vsub.s32 %v398, 127
        %v400 = vand.u32 2147483647, %v389
        %v401 = vand.u32 %v400, 8388607
        %v402 = vor.u32 %v401, 8388608
        %v403 = vsub.s32 0, %v402
        %v404 = vadd.s32 %v399, 1
        %vm405 = vcmp.gt.s32.totalorder %v404, 0
        %v406 = vsel %vm405, %v404, 0
        %v407 = vshrl.u32 %v406, 5
        %v408 = vand.u32 %v406, 31
        %v409 = vsub.s32 32, %v408
        %v410 = vshrl.u32 683565275, %v409
        %v411 = vshll.u32 683565275, %v408
        %v412 = vshrl.u32 2475754826, %v409
        %v413 = vor.u32 %v411, %v412
        %v414 = vshll.u32 2475754826, %v408
        %v415 = vshrl.u32 2131351028, %v409
        %v416 = vor.u32 %v414, %v415
        %v417 = vshll.u32 2131351028, %v408
        %v418 = vshrl.u32 2102212464, %v409
        %v419 = vor.u32 %v417, %v418
        %v420 = vshll.u32 2102212464, %v408
        %v421 = vshrl.u32 920167782, %v409
        %v422 = vor.u32 %v420, %v421
        %v423 = vshll.u32 920167782, %v408
        %v424 = vshrl.u32 1326507024, %v409
        %v425 = vor.u32 %v423, %v424
        %vm426 = vcmp.lt.s32.totalorder %v407, 1
        %vm427 = vcmp.lt.s32.totalorder %v407, 2
        %vm428 = vcmp.lt.s32.totalorder %v407, 3
        %vm429 = vcmp.lt.s32.totalorder %v407, 4
        %v430 = vsel %vm426, %v410, %v413
        %v431 = vsel %vm429, %v419, 2102212464
        %v432 = vsel %vm428, %v416, %v431
        %v433 = vsel %vm427, %v430, %v432
        %v434 = vsel %vm426, %v413, %v416
        %v435 = vsel %vm429, %v422, 920167782
        %v436 = vsel %vm428, %v419, %v435
        %v437 = vsel %vm427, %v434, %v436
        %v438 = vsel %vm426, %v416, %v419
        %v439 = vsel %vm429, %v425, 1326507024
        %v440 = vsel %vm428, %v422, %v439
        %v441 = vsel %vm427, %v438, %v440
        %v442 = vshll.u32 %v402, 8
        %v443 = vmul.u32.u64.compose %v442, %v441
        %v444 = vextract.low.u32 %v443
        %v445 = vextract.high.u32 %v443
        %v446 = vmul.u32.u64.compose %v442, %v437
        %v447 = vextract.low.u32 %v446
        %v448 = vextract.high.u32 %v446
        %v449 = vmul.u32 %v442, %v433
        %v450 = vadd.s32 %v445, %v447
        %vm451 = vc.u32 %v445, %v447
        %v452 = vadd.s32 %v448, 1
        %v453 = vsel %vm451, %v452, %v448
        %v454 = vadd.s32 %v449, %v453
        %v455 = vadd.s32 %v454, 536870912
        %v456 = vshrl.u32 %v455, 30
        %v457 = vshll.u32 %v456, 30
        %v458 = vsub.s32 %v454, %v457
        %vm459 = vcmp.lt.s32.totalorder %v458, 0
        %v460 = vsub.s32 0, %v458
        %v461 = vsel %vm459, %v460, %v458
        %v462 = vclz %v461
        %v463 = vsub.s32 %v462, 2
        %vm464 = vcmp.gt.s32.totalorder 0, %v463
        %v465 = vsel %vm464, 0, %v463
        %v466 = vsub.s32 32, %v465
        %v467 = vshll.u32 %v458, %v465
        %v468 = vshrl.u32 %v450, %v466
        %v469 = vor.u32 %v467, %v468
        %v470 = vsub.s32 4294967266, %v465
        %v471 = vadd.s32 %v470, 127
        %v472 = vshll.u32 %v471, 23
        %v473 = vor.u32 4788187, %v472
        %v474 = vand.u32 2147483647, %v473
        %v476 = vcvt.s32.f32 %v469
        %v477 = vmul.f32 %v476, %v474
        %v478 = vxor.u32 %v477, 2147483648
        %v479 = vsel %vm396, %v478, %v477
        %v480 = vsub.s32 4, %v456
        %v481 = vsel %vm396, %v480, %v456
        %v482 = vsel %vm395, %v389, %v479
        %v483 = vsel %vm395, 0, %v481
        %v484 = vcosq.f32.pop %v482
        %v485 = vsinq.f32.pop %v482
        %vm486 = vweird.f32 %v389
        %v487 = vadd.s32 %v483, 3
        %v488 = vand.u32 %v487, 3
        %vm489 = vcmp.lt.s32.totalorder %v488, 2
        %vm490 = vcmp.eq.s32.totalorder %v488, 0
        %v491 = vxor.u32 %v485, 2147483648
        %v492 = vsel %vm490, %v484, %v491
        %vm493 = vcmp.eq.s32.totalorder %v488, 2
        %v494 = vxor.u32 %v484, 2147483648
        %v495 = vsel %vm493, %v494, %v485
        %v496 = vsel %vm489, %v492, %v495
        %v497 = vsel %vm486, nan, %v496
        %vm498 = vcmask 64512
        %v500 = vsel %vm498, %v390, 0
        %v503 = vsel %vm498, %v391, 0
        %v506 = vsel %vm498, %v392, 0
        %v509 = vsel %vm498, %v393, 0
        %511 = vmatprep.subr.mxu0 0.0
        %512 = vmatpush1.msra.mxu0 %v497
        %513 = vmatprep.subr.mxu0 0.0
        %514 = vmatpush1.msra.mxu0 0.0
        %515 = vmatprep.subr.mxu0 0.0
        %516 = vmatpush1.msra.mxu0 0.0
        %517 = vmatprep.subr.mxu0 0.0
        %518 = vmatpush1.msra.mxu0 0.0
        %519 = vmatprep.subr.mxu0 0.0
        %520 = vmatpush1.msra.mxu0 0.0
        %521 = vmatprep.subr.mxu0 0.0
        %522 = vmatpush1.msra.mxu0 0.0
        %523 = vmatprep.subr.mxu0 0.0
        %524 = vmatpush1.msra.mxu0 0.0
        %525 = vmatprep.subr.mxu0 0.0
        %526 = vmatpush1.msra.mxu0 0.0
        %527 = vmatprep.subr.mxu0 0.0
        %528 = vmatpush1.msra.mxu0 0.0
        %529 = vmatprep.subr.mxu0 0.0
        %530 = vmatpush1.msra.mxu0 0.0
        %531 = vmatprep.subr.mxu0 0.0
        %532 = vmatpush1.msra.mxu0 0.0
        %533 = vmatprep.subr.mxu0 0.0
        %534 = vmatpush1.msra.mxu0 0.0
        %535 = vmatprep.subr.mxu0 0.0
        %536 = vmatpush1.msra.mxu0 0.0
        %537 = vmatprep.subr.mxu0 0.0
        %538 = vmatpush1.msra.mxu0 0.0
        %539 = vmatprep.subr.mxu0 0.0
        %540 = vmatpush1.msra.mxu0 0.0
        %541 = vmatprep.subr.mxu0 0.0
        %542 = vmatpush1.msra.mxu0 0.0
        %543 = vmatprep.subr.mxu0 0.0
        %544 = vmatpush1.msra.mxu0 0.0
        %545 = vmatprep.subr.mxu0 0.0
        %546 = vmatpush1.msra.mxu0 0.0
        %547 = vmatprep.subr.mxu0 0.0
        %548 = vmatpush1.msra.mxu0 0.0
        %549 = vmatprep.subr.mxu0 0.0
        %550 = vmatpush1.msra.mxu0 0.0
        %551 = vmatprep.subr.mxu0 0.0
        %552 = vmatpush1.msra.mxu0 0.0
        %553 = vmatprep.subr.mxu0 0.0
        %554 = vmatpush1.msra.mxu0 0.0
        %555 = vmatprep.subr.mxu0 0.0
        %556 = vmatpush1.msra.mxu0 0.0
        %557 = vmatprep.subr.mxu0 0.0
        %558 = vmatpush1.msra.mxu0 0.0
        %559 = vmatprep.subr.mxu0 0.0
        %560 = vmatpush1.msra.mxu0 0.0
        %561 = vmatprep.subr.mxu0 0.0
        %562 = vmatpush1.msra.mxu0 0.0
        %563 = vmatprep.subr.mxu0 0.0
        %564 = vmatpush1.msra.mxu0 0.0
        %565 = vmatprep.subr.mxu0 0.0
        %566 = vmatpush1.msra.mxu0 0.0
        %567 = vmatprep.subr.mxu0 0.0
        %568 = vmatpush1.msra.mxu0 0.0
        %569 = vmatprep.subr.mxu0 0.0
        %570 = vmatpush1.msra.mxu0 0.0
        %571 = vmatprep.subr.mxu0 0.0
        %572 = vmatpush1.msra.mxu0 0.0
        %573 = vmatprep.subr.mxu0 0.0
        %574 = vmatpush1.msra.mxu0 0.0
        %575 = vmatprep.mubr.f32.mxu0 0.0
        %576 = vmatmul.mubr.f32.gmra.mrb[0].mxu0 %v500
        %v577 = vpop.f32.mrb[0].mxu0
        %v578 = vadd.f32 0.0, %v577
        %v579 = vpop.f32.mrb[0].mxu0
        %580 = vmatprep.mubr.f32.mxu0 0.0
        %581 = vmatmul.mubr.f32.gmra.mrb[0].mxu0 %v503
        %v582 = vpop.f32.mrb[0].mxu0
        %v583 = vadd.f32 0.0, %v582
        %v584 = vpop.f32.mrb[0].mxu0
        %585 = vmatprep.mubr.f32.mxu0 0.0
        %586 = vmatmul.mubr.f32.gmra.mrb[0].mxu0 %v506
        %v587 = vpop.f32.mrb[0].mxu0
        %v588 = vadd.f32 0.0, %v587
        %v589 = vpop.f32.mrb[0].mxu0
        %590 = vmatprep.mubr.f32.mxu0 0.0
        %591 = vmatmul.mubr.f32.gmra.mrb[0].mxu0 %v509
        %v592 = vpop.f32.mrb[0].mxu0
        %v593 = vadd.f32 0.0, %v592
        %v594 = vpop.f32.mrb[0].mxu0
        %595 = vdwg.mxu0
        %v596 = vadd.f32 %v362, %v578
        %v597 = vadd.f32 %v367, %v583
        %v598 = vadd.f32 %v372, %v588
        %v599 = vadd.f32 %v377, %v593
        %v600 = vld [vmem:[%s3] sm:$0xff]
        %v601 = vld [vmem:[%s3 + $0x8] sm:$0xff]
        %v602 = vld [vmem:[%s3 + $0x10] sm:$0xff]
        %v603 = vld [vmem:[%s3 + $0x18] sm:$0xff]
        %v604 = vand.u32 2147483647, %v389
        %vm605 = vcmp.le.f32.partialorder %v604, 0.7853982
        %vm606 = vcmp.lt.s32.totalorder %v389, 0
        %v607 = vand.u32 %v389, 2139095040
        %v608 = vshrl.u32 %v607, 23
        %v609 = vsub.s32 %v608, 127
        %v610 = vand.u32 2147483647, %v389
        %v611 = vand.u32 %v610, 8388607
        %v612 = vor.u32 %v611, 8388608
        %v613 = vsub.s32 0, %v612
        %v614 = vadd.s32 %v609, 1
        %vm615 = vcmp.gt.s32.totalorder %v614, 0
        %v616 = vsel %vm615, %v614, 0
        %v617 = vshrl.u32 %v616, 5
        %v618 = vand.u32 %v616, 31
        %v619 = vsub.s32 32, %v618
        %v620 = vshrl.u32 683565275, %v619
        %v621 = vshll.u32 683565275, %v618
        %v622 = vshrl.u32 2475754826, %v619
        %v623 = vor.u32 %v621, %v622
        %v624 = vshll.u32 2475754826, %v618
        %v625 = vshrl.u32 2131351028, %v619
        %v626 = vor.u32 %v624, %v625
        %v627 = vshll.u32 2131351028, %v618
        %v628 = vshrl.u32 2102212464, %v619
        %v629 = vor.u32 %v627, %v628
        %v630 = vshll.u32 2102212464, %v618
        %v631 = vshrl.u32 920167782, %v619
        %v632 = vor.u32 %v630, %v631
        %v633 = vshll.u32 920167782, %v618
        %v634 = vshrl.u32 1326507024, %v619
        %v635 = vor.u32 %v633, %v634
        %vm636 = vcmp.lt.s32.totalorder %v617, 1
        %vm637 = vcmp.lt.s32.totalorder %v617, 2
        %vm638 = vcmp.lt.s32.totalorder %v617, 3
        %vm639 = vcmp.lt.s32.totalorder %v617, 4
        %v640 = vsel %vm636, %v620, %v623
        %v641 = vsel %vm639, %v629, 2102212464
        %v642 = vsel %vm638, %v626, %v641
        %v643 = vsel %vm637, %v640, %v642
        %v644 = vsel %vm636, %v623, %v626
        %v645 = vsel %vm639, %v632, 920167782
        %v646 = vsel %vm638, %v629, %v645
        %v647 = vsel %vm637, %v644, %v646
        %v648 = vsel %vm636, %v626, %v629
        %v649 = vsel %vm639, %v635, 1326507024
        %v650 = vsel %vm638, %v632, %v649
        %v651 = vsel %vm637, %v648, %v650
        %v652 = vshll.u32 %v612, 8
        %v653 = vmul.u32.u64.compose %v652, %v651
        %v654 = vextract.low.u32 %v653
        %v655 = vextract.high.u32 %v653
        %v656 = vmul.u32.u64.compose %v652, %v647
        %v657 = vextract.low.u32 %v656
        %v658 = vextract.high.u32 %v656
        %v659 = vmul.u32 %v652, %v643
        %v660 = vadd.s32 %v655, %v657
        %vm661 = vc.u32 %v655, %v657
        %v662 = vadd.s32 %v658, 1
        %v663 = vsel %vm661, %v662, %v658
        %v664 = vadd.s32 %v659, %v663
        %v665 = vadd.s32 %v664, 536870912
        %v666 = vshrl.u32 %v665, 30
        %v667 = vshll.u32 %v666, 30
        %v668 = vsub.s32 %v664, %v667
        %vm669 = vcmp.lt.s32.totalorder %v668, 0
        %v670 = vsub.s32 0, %v668
        %v671 = vsel %vm669, %v670, %v668
        %v672 = vclz %v671
        %v673 = vsub.s32 %v672, 2
        %vm674 = vcmp.gt.s32.totalorder 0, %v673
        %v675 = vsel %vm674, 0, %v673
        %v676 = vsub.s32 32, %v675
        %v677 = vshll.u32 %v668, %v675
        %v678 = vshrl.u32 %v660, %v676
        %v679 = vor.u32 %v677, %v678
        %v680 = vsub.s32 4294967266, %v675
        %v681 = vadd.s32 %v680, 127
        %v682 = vshll.u32 %v681, 23
        %v683 = vor.u32 4788187, %v682
        %v684 = vand.u32 2147483647, %v683
        %v686 = vcvt.s32.f32 %v679
        %v687 = vmul.f32 %v686, %v684
        %v688 = vxor.u32 %v687, 2147483648
        %v689 = vsel %vm606, %v688, %v687
        %v690 = vsub.s32 4, %v666
        %v691 = vsel %vm606, %v690, %v666
        %v692 = vsel %vm605, %v389, %v689
        %v693 = vsel %vm605, 0, %v691
        %v694 = vcosq.f32.pop %v692
        %v695 = vsinq.f32.pop %v692
        %vm696 = vweird.f32 %v389
        %v697 = vand.u32 %v693, 3
        %vm698 = vcmp.lt.s32.totalorder %v697, 2
        %vm699 = vcmp.eq.s32.totalorder %v697, 0
        %v700 = vxor.u32 %v695, 2147483648
        %v701 = vsel %vm699, %v694, %v700
        %vm702 = vcmp.eq.s32.totalorder %v697, 2
        %v703 = vxor.u32 %v694, 2147483648
        %v704 = vsel %vm702, %v703, %v695
        %v705 = vsel %vm698, %v701, %v704
        %v706 = vsel %vm696, nan, %v705
        %v708 = vsel %vm498, %v600, 0
        %v711 = vsel %vm498, %v601, 0
        %v714 = vsel %vm498, %v602, 0
        %v717 = vsel %vm498, %v603, 0
        %719 = vmatprep.subr.mxu0 0.0
        %720 = vmatpush1.msra.mxu0 %v706
        %721 = vmatprep.subr.mxu0 0.0
        %722 = vmatpush1.msra.mxu0 0.0
        %723 = vmatprep.subr.mxu0 0.0
        %724 = vmatpush1.msra.mxu0 0.0
        %725 = vmatprep.subr.mxu0 0.0
        %726 = vmatpush1.msra.mxu0 0.0
        %727 = vmatprep.subr.mxu0 0.0
        %728 = vmatpush1.msra.mxu0 0.0
        %729 = vmatprep.subr.mxu0 0.0
        %730 = vmatpush1.msra.mxu0 0.0
        %731 = vmatprep.subr.mxu0 0.0
        %732 = vmatpush1.msra.mxu0 0.0
        %733 = vmatprep.subr.mxu0 0.0
        %734 = vmatpush1.msra.mxu0 0.0
        %735 = vmatprep.subr.mxu0 0.0
        %736 = vmatpush1.msra.mxu0 0.0
        %737 = vmatprep.subr.mxu0 0.0
        %738 = vmatpush1.msra.mxu0 0.0
        %739 = vmatprep.subr.mxu0 0.0
        %740 = vmatpush1.msra.mxu0 0.0
        %741 = vmatprep.subr.mxu0 0.0
        %742 = vmatpush1.msra.mxu0 0.0
        %743 = vmatprep.subr.mxu0 0.0
        %744 = vmatpush1.msra.mxu0 0.0
        %745 = vmatprep.subr.mxu0 0.0
        %746 = vmatpush1.msra.mxu0 0.0
        %747 = vmatprep.subr.mxu0 0.0
        %748 = vmatpush1.msra.mxu0 0.0
        %749 = vmatprep.subr.mxu0 0.0
        %750 = vmatpush1.msra.mxu0 0.0
        %751 = vmatprep.subr.mxu0 0.0
        %752 = vmatpush1.msra.mxu0 0.0
        %753 = vmatprep.subr.mxu0 0.0
        %754 = vmatpush1.msra.mxu0 0.0
        %755 = vmatprep.subr.mxu0 0.0
        %756 = vmatpush1.msra.mxu0 0.0
        %757 = vmatprep.subr.mxu0 0.0
        %758 = vmatpush1.msra.mxu0 0.0
        %759 = vmatprep.subr.mxu0 0.0
        %760 = vmatpush1.msra.mxu0 0.0
        %761 = vmatprep.subr.mxu0 0.0
        %762 = vmatpush1.msra.mxu0 0.0
        %763 = vmatprep.subr.mxu0 0.0
        %764 = vmatpush1.msra.mxu0 0.0
        %765 = vmatprep.subr.mxu0 0.0
        %766 = vmatpush1.msra.mxu0 0.0
        %767 = vmatprep.subr.mxu0 0.0
        %768 = vmatpush1.msra.mxu0 0.0
        %769 = vmatprep.subr.mxu0 0.0
        %770 = vmatpush1.msra.mxu0 0.0
        %771 = vmatprep.subr.mxu0 0.0
        %772 = vmatpush1.msra.mxu0 0.0
        %773 = vmatprep.subr.mxu0 0.0
        %774 = vmatpush1.msra.mxu0 0.0
        %775 = vmatprep.subr.mxu0 0.0
        %776 = vmatpush1.msra.mxu0 0.0
        %777 = vmatprep.subr.mxu0 0.0
        %778 = vmatpush1.msra.mxu0 0.0
        %779 = vmatprep.subr.mxu0 0.0
        %780 = vmatpush1.msra.mxu0 0.0
        %781 = vmatprep.subr.mxu0 0.0
        %782 = vmatpush1.msra.mxu0 0.0
        %783 = vmatprep.mubr.f32.mxu0 0.0
        %784 = vmatmul.mubr.f32.gmra.mrb[0].mxu0 %v708
        %v785 = vpop.f32.mrb[0].mxu0
        %v786 = vadd.f32 0.0, %v785
        %v787 = vpop.f32.mrb[0].mxu0
        %788 = vmatprep.mubr.f32.mxu0 0.0
        %789 = vmatmul.mubr.f32.gmra.mrb[0].mxu0 %v711
        %v790 = vpop.f32.mrb[0].mxu0
        %v791 = vadd.f32 0.0, %v790
        %v792 = vpop.f32.mrb[0].mxu0
        %793 = vmatprep.mubr.f32.mxu0 0.0
        %794 = vmatmul.mubr.f32.gmra.mrb[0].mxu0 %v714
        %v795 = vpop.f32.mrb[0].mxu0
        %v796 = vadd.f32 0.0, %v795
        %v797 = vpop.f32.mrb[0].mxu0
        %798 = vmatprep.mubr.f32.mxu0 0.0
        %799 = vmatmul.mubr.f32.gmra.mrb[0].mxu0 %v717
        %v800 = vpop.f32.mrb[0].mxu0
        %v801 = vadd.f32 0.0, %v800
        %v802 = vpop.f32.mrb[0].mxu0
        %803 = vdwg.mxu0
        %v804 = vadd.f32 %v596, %v786
        %v805 = vadd.f32 %v597, %v791
        %v806 = vadd.f32 %v598, %v796
        %v807 = vadd.f32 %v599, %v801
        %v808 = vlaneseq
        %v809 = vshrl.u32 %v808, 7
        %v810 = vsub.s32 1, %v809
        %v811 = vrot.slane %v248, %v810
        %v812 = vmul.f32 %v811, %v387
        %s813 = scalar_lea.vmem %s2, 32
        %v814 = vld [vmem:[%s813] sm:$0xff]
        %v815 = vld [vmem:[%s813 + $0x8] sm:$0xff]
        %v816 = vld [vmem:[%s813 + $0x10] sm:$0xff]
        %v817 = vld [vmem:[%s813 + $0x18] sm:$0xff]
        %v818 = vand.u32 2147483647, %v812
        %vm819 = vcmp.le.f32.partialorder %v818, 0.7853982
        %vm820 = vcmp.lt.s32.totalorder %v812, 0
        %v821 = vand.u32 %v812, 2139095040
        %v822 = vshrl.u32 %v821, 23
        %v823 = vsub.s32 %v822, 127
        %v824 = vand.u32 2147483647, %v812
        %v825 = vand.u32 %v824, 8388607
        %v826 = vor.u32 %v825, 8388608
        %v827 = vsub.s32 0, %v826
        %v828 = vadd.s32 %v823, 1
        %vm829 = vcmp.gt.s32.totalorder %v828, 0
        %v830 = vsel %vm829, %v828, 0
        %v831 = vshrl.u32 %v830, 5
        %v832 = vand.u32 %v830, 31
        %v833 = vsub.s32 32, %v832
        %v834 = vshrl.u32 683565275, %v833
        %v835 = vshll.u32 683565275, %v832
        %v836 = vshrl.u32 2475754826, %v833
        %v837 = vor.u32 %v835, %v836
        %v838 = vshll.u32 2475754826, %v832
        %v839 = vshrl.u32 2131351028, %v833
        %v840 = vor.u32 %v838, %v839
        %v841 = vshll.u32 2131351028, %v832
        %v842 = vshrl.u32 2102212464, %v833
        %v843 = vor.u32 %v841, %v842
        %v844 = vshll.u32 2102212464, %v832
        %v845 = vshrl.u32 920167782, %v833
        %v846 = vor.u32 %v844, %v845
        %v847 = vshll.u32 920167782, %v832
        %v848 = vshrl.u32 1326507024, %v833
        %v849 = vor.u32 %v847, %v848
        %vm850 = vcmp.lt.s32.totalorder %v831, 1
        %vm851 = vcmp.lt.s32.totalorder %v831, 2
        %vm852 = vcmp.lt.s32.totalorder %v831, 3
        %vm853 = vcmp.lt.s32.totalorder %v831, 4
        %v854 = vsel %vm850, %v834, %v837
        %v855 = vsel %vm853, %v843, 2102212464
        %v856 = vsel %vm852, %v840, %v855
        %v857 = vsel %vm851, %v854, %v856
        %v858 = vsel %vm850, %v837, %v840
        %v859 = vsel %vm853, %v846, 920167782
        %v860 = vsel %vm852, %v843, %v859
        %v861 = vsel %vm851, %v858, %v860
        %v862 = vsel %vm850, %v840, %v843
        %v863 = vsel %vm853, %v849, 1326507024
        %v864 = vsel %vm852, %v846, %v863
        %v865 = vsel %vm851, %v862, %v864
        %v866 = vshll.u32 %v826, 8
        %v867 = vmul.u32.u64.compose %v866, %v865
        %v868 = vextract.low.u32 %v867
        %v869 = vextract.high.u32 %v867
        %v870 = vmul.u32.u64.compose %v866, %v861
        %v871 = vextract.low.u32 %v870
        %v872 = vextract.high.u32 %v870
        %v873 = vmul.u32 %v866, %v857
        %v874 = vadd.s32 %v869, %v871
        %vm875 = vc.u32 %v869, %v871
        %v876 = vadd.s32 %v872, 1
        %v877 = vsel %vm875, %v876, %v872
        %v878 = vadd.s32 %v873, %v877
        %v879 = vadd.s32 %v878, 536870912
        %v880 = vshrl.u32 %v879, 30
        %v881 = vshll.u32 %v880, 30
        %v882 = vsub.s32 %v878, %v881
        %vm883 = vcmp.lt.s32.totalorder %v882, 0
        %v884 = vsub.s32 0, %v882
        %v885 = vsel %vm883, %v884, %v882
        %v886 = vclz %v885
        %v887 = vsub.s32 %v886, 2
        %vm888 = vcmp.gt.s32.totalorder 0, %v887
        %v889 = vsel %vm888, 0, %v887
        %v890 = vsub.s32 32, %v889
        %v891 = vshll.u32 %v882, %v889
        %v892 = vshrl.u32 %v874, %v890
        %v893 = vor.u32 %v891, %v892
        %v894 = vsub.s32 4294967266, %v889
        %v895 = vadd.s32 %v894, 127
        %v896 = vshll.u32 %v895, 23
        %v897 = vor.u32 4788187, %v896
        %v898 = vand.u32 2147483647, %v897
        %v900 = vcvt.s32.f32 %v893
        %v901 = vmul.f32 %v900, %v898
        %v902 = vxor.u32 %v901, 2147483648
        %v903 = vsel %vm820, %v902, %v901
        %v904 = vsub.s32 4, %v880
        %v905 = vsel %vm820, %v904, %v880
        %v906 = vsel %vm819, %v812, %v903
        %v907 = vsel %vm819, 0, %v905
        %v908 = vcosq.f32.pop %v906
        %v909 = vsinq.f32.pop %v906
        %vm910 = vweird.f32 %v812
        %v911 = vadd.s32 %v907, 3
        %v912 = vand.u32 %v911, 3
        %vm913 = vcmp.lt.s32.totalorder %v912, 2
        %vm914 = vcmp.eq.s32.totalorder %v912, 0
        %v915 = vxor.u32 %v909, 2147483648
        %v916 = vsel %vm914, %v908, %v915
        %vm917 = vcmp.eq.s32.totalorder %v912, 2
        %v918 = vxor.u32 %v908, 2147483648
        %v919 = vsel %vm917, %v918, %v909
        %v920 = vsel %vm913, %v916, %v919
        %v921 = vsel %vm910, nan, %v920
        %v923 = vsel %vm498, %v814, 0
        %v926 = vsel %vm498, %v815, 0
        %v929 = vsel %vm498, %v816, 0
        %v932 = vsel %vm498, %v817, 0
        %934 = vmatprep.subr.mxu0 0.0
        %935 = vmatpush1.msra.mxu0 %v921
        %936 = vmatprep.subr.mxu0 0.0
        %937 = vmatpush1.msra.mxu0 0.0
        %938 = vmatprep.subr.mxu0 0.0
        %939 = vmatpush1.msra.mxu0 0.0
        %940 = vmatprep.subr.mxu0 0.0
        %941 = vmatpush1.msra.mxu0 0.0
        %942 = vmatprep.subr.mxu0 0.0
        %943 = vmatpush1.msra.mxu0 0.0
        %944 = vmatprep.subr.mxu0 0.0
        %945 = vmatpush1.msra.mxu0 0.0
        %946 = vmatprep.subr.mxu0 0.0
        %947 = vmatpush1.msra.mxu0 0.0
        %948 = vmatprep.subr.mxu0 0.0
        %949 = vmatpush1.msra.mxu0 0.0
        %950 = vmatprep.subr.mxu0 0.0
        %951 = vmatpush1.msra.mxu0 0.0
        %952 = vmatprep.subr.mxu0 0.0
        %953 = vmatpush1.msra.mxu0 0.0
        %954 = vmatprep.subr.mxu0 0.0
        %955 = vmatpush1.msra.mxu0 0.0
        %956 = vmatprep.subr.mxu0 0.0
        %957 = vmatpush1.msra.mxu0 0.0
        %958 = vmatprep.subr.mxu0 0.0
        %959 = vmatpush1.msra.mxu0 0.0
        %960 = vmatprep.subr.mxu0 0.0
        %961 = vmatpush1.msra.mxu0 0.0
        %962 = vmatprep.subr.mxu0 0.0
        %963 = vmatpush1.msra.mxu0 0.0
        %964 = vmatprep.subr.mxu0 0.0
        %965 = vmatpush1.msra.mxu0 0.0
        %966 = vmatprep.subr.mxu0 0.0
        %967 = vmatpush1.msra.mxu0 0.0
        %968 = vmatprep.subr.mxu0 0.0
        %969 = vmatpush1.msra.mxu0 0.0
        %970 = vmatprep.subr.mxu0 0.0
        %971 = vmatpush1.msra.mxu0 0.0
        %972 = vmatprep.subr.mxu0 0.0
        %973 = vmatpush1.msra.mxu0 0.0
        %974 = vmatprep.subr.mxu0 0.0
        %975 = vmatpush1.msra.mxu0 0.0
        %976 = vmatprep.subr.mxu0 0.0
        %977 = vmatpush1.msra.mxu0 0.0
        %978 = vmatprep.subr.mxu0 0.0
        %979 = vmatpush1.msra.mxu0 0.0
        %980 = vmatprep.subr.mxu0 0.0
        %981 = vmatpush1.msra.mxu0 0.0
        %982 = vmatprep.subr.mxu0 0.0
        %983 = vmatpush1.msra.mxu0 0.0
        %984 = vmatprep.subr.mxu0 0.0
        %985 = vmatpush1.msra.mxu0 0.0
        %986 = vmatprep.subr.mxu0 0.0
        %987 = vmatpush1.msra.mxu0 0.0
        %988 = vmatprep.subr.mxu0 0.0
        %989 = vmatpush1.msra.mxu0 0.0
        %990 = vmatprep.subr.mxu0 0.0
        %991 = vmatpush1.msra.mxu0 0.0
        %992 = vmatprep.subr.mxu0 0.0
        %993 = vmatpush1.msra.mxu0 0.0
        %994 = vmatprep.subr.mxu0 0.0
        %995 = vmatpush1.msra.mxu0 0.0
        %996 = vmatprep.subr.mxu0 0.0
        %997 = vmatpush1.msra.mxu0 0.0
        %998 = vmatprep.mubr.f32.mxu0 0.0
        %999 = vmatmul.mubr.f32.gmra.mrb[0].mxu0 %v923
        %v1000 = vpop.f32.mrb[0].mxu0
        %v1001 = vadd.f32 0.0, %v1000
        %v1002 = vpop.f32.mrb[0].mxu0
        %1003 = vmatprep.mubr.f32.mxu0 0.0
        %1004 = vmatmul.mubr.f32.gmra.mrb[0].mxu0 %v926
        %v1005 = vpop.f32.mrb[0].mxu0
        %v1006 = vadd.f32 0.0, %v1005
        %v1007 = vpop.f32.mrb[0].mxu0
        %1008 = vmatprep.mubr.f32.mxu0 0.0
        %1009 = vmatmul.mubr.f32.gmra.mrb[0].mxu0 %v929
        %v1010 = vpop.f32.mrb[0].mxu0
        %v1011 = vadd.f32 0.0, %v1010
        %v1012 = vpop.f32.mrb[0].mxu0
        %1013 = vmatprep.mubr.f32.mxu0 0.0
        %1014 = vmatmul.mubr.f32.gmra.mrb[0].mxu0 %v932
        %v1015 = vpop.f32.mrb[0].mxu0
        %v1016 = vadd.f32 0.0, %v1015
        %v1017 = vpop.f32.mrb[0].mxu0
        %1018 = vdwg.mxu0
        %v1019 = vadd.f32 %v804, %v1001
        %v1020 = vadd.f32 %v805, %v1006
        %v1021 = vadd.f32 %v806, %v1011
        %v1022 = vadd.f32 %v807, %v1016
        %s1023 = scalar_lea.vmem %s3, 32
        %v1024 = vld [vmem:[%s1023] sm:$0xff]
        %v1025 = vld [vmem:[%s1023 + $0x8] sm:$0xff]
        %v1026 = vld [vmem:[%s1023 + $0x10] sm:$0xff]
        %v1027 = vld [vmem:[%s1023 + $0x18] sm:$0xff]
        %v1028 = vand.u32 2147483647, %v812
        %vm1029 = vcmp.le.f32.partialorder %v1028, 0.7853982
        %vm1030 = vcmp.lt.s32.totalorder %v812, 0
        %v1031 = vand.u32 %v812, 2139095040
        %v1032 = vshrl.u32 %v1031, 23
        %v1033 = vsub.s32 %v1032, 127
        %v1034 = vand.u32 2147483647, %v812
        %v1035 = vand.u32 %v1034, 8388607
        %v1036 = vor.u32 %v1035, 8388608
        %v1037 = vsub.s32 0, %v1036
        %v1038 = vadd.s32 %v1033, 1
        %vm1039 = vcmp.gt.s32.totalorder %v1038, 0
        %v1040 = vsel %vm1039, %v1038, 0
        %v1041 = vshrl.u32 %v1040, 5
        %v1042 = vand.u32 %v1040, 31
        %v1043 = vsub.s32 32, %v1042
        %v1044 = vshrl.u32 683565275, %v1043
        %v1045 = vshll.u32 683565275, %v1042
        %v1046 = vshrl.u32 2475754826, %v1043
        %v1047 = vor.u32 %v1045, %v1046
        %v1048 = vshll.u32 2475754826, %v1042
        %v1049 = vshrl.u32 2131351028, %v1043
        %v1050 = vor.u32 %v1048, %v1049
        %v1051 = vshll.u32 2131351028, %v1042
        %v1052 = vshrl.u32 2102212464, %v1043
        %v1053 = vor.u32 %v1051, %v1052
        %v1054 = vshll.u32 2102212464, %v1042
        %v1055 = vshrl.u32 920167782, %v1043
        %v1056 = vor.u32 %v1054, %v1055
        %v1057 = vshll.u32 920167782, %v1042
        %v1058 = vshrl.u32 1326507024, %v1043
        %v1059 = vor.u32 %v1057, %v1058
        %vm1060 = vcmp.lt.s32.totalorder %v1041, 1
        %vm1061 = vcmp.lt.s32.totalorder %v1041, 2
        %vm1062 = vcmp.lt.s32.totalorder %v1041, 3
        %vm1063 = vcmp.lt.s32.totalorder %v1041, 4
        %v1064 = vsel %vm1060, %v1044, %v1047
        %v1065 = vsel %vm1063, %v1053, 2102212464
        %v1066 = vsel %vm1062, %v1050, %v1065
        %v1067 = vsel %vm1061, %v1064, %v1066
        %v1068 = vsel %vm1060, %v1047, %v1050
        %v1069 = vsel %vm1063, %v1056, 920167782
        %v1070 = vsel %vm1062, %v1053, %v1069
        %v1071 = vsel %vm1061, %v1068, %v1070
        %v1072 = vsel %vm1060, %v1050, %v1053
        %v1073 = vsel %vm1063, %v1059, 1326507024
        %v1074 = vsel %vm1062, %v1056, %v1073
        %v1075 = vsel %vm1061, %v1072, %v1074
        %v1076 = vshll.u32 %v1036, 8
        %v1077 = vmul.u32.u64.compose %v1076, %v1075
        %v1078 = vextract.low.u32 %v1077
        %v1079 = vextract.high.u32 %v1077
        %v1080 = vmul.u32.u64.compose %v1076, %v1071
        %v1081 = vextract.low.u32 %v1080
        %v1082 = vextract.high.u32 %v1080
        %v1083 = vmul.u32 %v1076, %v1067
        %v1084 = vadd.s32 %v1079, %v1081
        %vm1085 = vc.u32 %v1079, %v1081
        %v1086 = vadd.s32 %v1082, 1
        %v1087 = vsel %vm1085, %v1086, %v1082
        %v1088 = vadd.s32 %v1083, %v1087
        %v1089 = vadd.s32 %v1088, 536870912
        %v1090 = vshrl.u32 %v1089, 30
        %v1091 = vshll.u32 %v1090, 30
        %v1092 = vsub.s32 %v1088, %v1091
        %vm1093 = vcmp.lt.s32.totalorder %v1092, 0
        %v1094 = vsub.s32 0, %v1092
        %v1095 = vsel %vm1093, %v1094, %v1092
        %v1096 = vclz %v1095
        %v1097 = vsub.s32 %v1096, 2
        %vm1098 = vcmp.gt.s32.totalorder 0, %v1097
        %v1099 = vsel %vm1098, 0, %v1097
        %v1100 = vsub.s32 32, %v1099
        %v1101 = vshll.u32 %v1092, %v1099
        %v1102 = vshrl.u32 %v1084, %v1100
        %v1103 = vor.u32 %v1101, %v1102
        %v1104 = vsub.s32 4294967266, %v1099
        %v1105 = vadd.s32 %v1104, 127
        %v1106 = vshll.u32 %v1105, 23
        %v1107 = vor.u32 4788187, %v1106
        %v1108 = vand.u32 2147483647, %v1107
        %v1110 = vcvt.s32.f32 %v1103
        %v1111 = vmul.f32 %v1110, %v1108
        %v1112 = vxor.u32 %v1111, 2147483648
        %v1113 = vsel %vm1030, %v1112, %v1111
        %v1114 = vsub.s32 4, %v1090
        %v1115 = vsel %vm1030, %v1114, %v1090
        %v1116 = vsel %vm1029, %v812, %v1113
        %v1117 = vsel %vm1029, 0, %v1115
        %v1118 = vcosq.f32.pop %v1116
        %v1119 = vsinq.f32.pop %v1116
        %vm1120 = vweird.f32 %v812
        %v1121 = vand.u32 %v1117, 3
        %vm1122 = vcmp.lt.s32.totalorder %v1121, 2
        %vm1123 = vcmp.eq.s32.totalorder %v1121, 0
        %v1124 = vxor.u32 %v1119, 2147483648
        %v1125 = vsel %vm1123, %v1118, %v1124
        %vm1126 = vcmp.eq.s32.totalorder %v1121, 2
        %v1127 = vxor.u32 %v1118, 2147483648
        %v1128 = vsel %vm1126, %v1127, %v1119
        %v1129 = vsel %vm1122, %v1125, %v1128
        %v1130 = vsel %vm1120, nan, %v1129
        %v1132 = vsel %vm498, %v1024, 0
        %v1135 = vsel %vm498, %v1025, 0
        %v1138 = vsel %vm498, %v1026, 0
        %v1141 = vsel %vm498, %v1027, 0
        %1143 = vmatprep.subr.mxu0 0.0
        %1144 = vmatpush1.msra.mxu0 %v1130
        %1145 = vmatprep.subr.mxu0 0.0
        %1146 = vmatpush1.msra.mxu0 0.0
        %1147 = vmatprep.subr.mxu0 0.0
        %1148 = vmatpush1.msra.mxu0 0.0
        %1149 = vmatprep.subr.mxu0 0.0
        %1150 = vmatpush1.msra.mxu0 0.0
        %1151 = vmatprep.subr.mxu0 0.0
        %1152 = vmatpush1.msra.mxu0 0.0
        %1153 = vmatprep.subr.mxu0 0.0
        %1154 = vmatpush1.msra.mxu0 0.0
        %1155 = vmatprep.subr.mxu0 0.0
        %1156 = vmatpush1.msra.mxu0 0.0
        %1157 = vmatprep.subr.mxu0 0.0
        %1158 = vmatpush1.msra.mxu0 0.0
        %1159 = vmatprep.subr.mxu0 0.0
        %1160 = vmatpush1.msra.mxu0 0.0
        %1161 = vmatprep.subr.mxu0 0.0
        %1162 = vmatpush1.msra.mxu0 0.0
        %1163 = vmatprep.subr.mxu0 0.0
        %1164 = vmatpush1.msra.mxu0 0.0
        %1165 = vmatprep.subr.mxu0 0.0
        %1166 = vmatpush1.msra.mxu0 0.0
        %1167 = vmatprep.subr.mxu0 0.0
        %1168 = vmatpush1.msra.mxu0 0.0
        %1169 = vmatprep.subr.mxu0 0.0
        %1170 = vmatpush1.msra.mxu0 0.0
        %1171 = vmatprep.subr.mxu0 0.0
        %1172 = vmatpush1.msra.mxu0 0.0
        %1173 = vmatprep.subr.mxu0 0.0
        %1174 = vmatpush1.msra.mxu0 0.0
        %1175 = vmatprep.subr.mxu0 0.0
        %1176 = vmatpush1.msra.mxu0 0.0
        %1177 = vmatprep.subr.mxu0 0.0
        %1178 = vmatpush1.msra.mxu0 0.0
        %1179 = vmatprep.subr.mxu0 0.0
        %1180 = vmatpush1.msra.mxu0 0.0
        %1181 = vmatprep.subr.mxu0 0.0
        %1182 = vmatpush1.msra.mxu0 0.0
        %1183 = vmatprep.subr.mxu0 0.0
        %1184 = vmatpush1.msra.mxu0 0.0
        %1185 = vmatprep.subr.mxu0 0.0
        %1186 = vmatpush1.msra.mxu0 0.0
        %1187 = vmatprep.subr.mxu0 0.0
        %1188 = vmatpush1.msra.mxu0 0.0
        %1189 = vmatprep.subr.mxu0 0.0
        %1190 = vmatpush1.msra.mxu0 0.0
        %1191 = vmatprep.subr.mxu0 0.0
        %1192 = vmatpush1.msra.mxu0 0.0
        %1193 = vmatprep.subr.mxu0 0.0
        %1194 = vmatpush1.msra.mxu0 0.0
        %1195 = vmatprep.subr.mxu0 0.0
        %1196 = vmatpush1.msra.mxu0 0.0
        %1197 = vmatprep.subr.mxu0 0.0
        %1198 = vmatpush1.msra.mxu0 0.0
        %1199 = vmatprep.subr.mxu0 0.0
        %1200 = vmatpush1.msra.mxu0 0.0
        %1201 = vmatprep.subr.mxu0 0.0
        %1202 = vmatpush1.msra.mxu0 0.0
        %1203 = vmatprep.subr.mxu0 0.0
        %1204 = vmatpush1.msra.mxu0 0.0
        %1205 = vmatprep.subr.mxu0 0.0
        %1206 = vmatpush1.msra.mxu0 0.0
        %1207 = vmatprep.mubr.f32.mxu0 0.0
        %1208 = vmatmul.mubr.f32.gmra.mrb[0].mxu0 %v1132
        %v1209 = vpop.f32.mrb[0].mxu0
        %v1210 = vadd.f32 0.0, %v1209
        %v1211 = vpop.f32.mrb[0].mxu0
        %1212 = vmatprep.mubr.f32.mxu0 0.0
        %1213 = vmatmul.mubr.f32.gmra.mrb[0].mxu0 %v1135
        %v1214 = vpop.f32.mrb[0].mxu0
        %v1215 = vadd.f32 0.0, %v1214
        %v1216 = vpop.f32.mrb[0].mxu0
        %1217 = vmatprep.mubr.f32.mxu0 0.0
        %1218 = vmatmul.mubr.f32.gmra.mrb[0].mxu0 %v1138
        %v1219 = vpop.f32.mrb[0].mxu0
        %v1220 = vadd.f32 0.0, %v1219
        %v1221 = vpop.f32.mrb[0].mxu0
        %1222 = vmatprep.mubr.f32.mxu0 0.0
        %1223 = vmatmul.mubr.f32.gmra.mrb[0].mxu0 %v1141
        %v1224 = vpop.f32.mrb[0].mxu0
        %v1225 = vadd.f32 0.0, %v1224
        %v1226 = vpop.f32.mrb[0].mxu0
        %1227 = vdwg.mxu0
        %v1228 = vadd.f32 %v1019, %v1210
        %v1229 = vadd.f32 %v1020, %v1215
        %v1230 = vadd.f32 %v1021, %v1220
        %v1231 = vadd.f32 %v1022, %v1225
        %v1232 = vlaneseq
        %v1233 = vshrl.u32 %v1232, 7
        %v1234 = vsub.s32 2, %v1233
        %v1235 = vrot.slane %v248, %v1234
        %v1236 = vmul.f32 %v1235, %v387
        %s1237 = scalar_lea.vmem %s2, 64
        %v1238 = vld [vmem:[%s1237] sm:$0xff]
        %v1239 = vld [vmem:[%s1237 + $0x8] sm:$0xff]
        %v1240 = vld [vmem:[%s1237 + $0x10] sm:$0xff]
        %v1241 = vld [vmem:[%s1237 + $0x18] sm:$0xff]
        %v1242 = vand.u32 2147483647, %v1236
        %vm1243 = vcmp.le.f32.partialorder %v1242, 0.7853982
        %vm1244 = vcmp.lt.s32.totalorder %v1236, 0
        %v1245 = vand.u32 %v1236, 2139095040
        %v1246 = vshrl.u32 %v1245, 23
        %v1247 = vsub.s32 %v1246, 127
        %v1248 = vand.u32 2147483647, %v1236
        %v1249 = vand.u32 %v1248, 8388607
        %v1250 = vor.u32 %v1249, 8388608
        %v1251 = vsub.s32 0, %v1250
        %v1252 = vadd.s32 %v1247, 1
        %vm1253 = vcmp.gt.s32.totalorder %v1252, 0
        %v1254 = vsel %vm1253, %v1252, 0
        %v1255 = vshrl.u32 %v1254, 5
        %v1256 = vand.u32 %v1254, 31
        %v1257 = vsub.s32 32, %v1256
        %v1258 = vshrl.u32 683565275, %v1257
        %v1259 = vshll.u32 683565275, %v1256
        %v1260 = vshrl.u32 2475754826, %v1257
        %v1261 = vor.u32 %v1259, %v1260
        %v1262 = vshll.u32 2475754826, %v1256
        %v1263 = vshrl.u32 2131351028, %v1257
        %v1264 = vor.u32 %v1262, %v1263
        %v1265 = vshll.u32 2131351028, %v1256
        %v1266 = vshrl.u32 2102212464, %v1257
        %v1267 = vor.u32 %v1265, %v1266
        %v1268 = vshll.u32 2102212464, %v1256
        %v1269 = vshrl.u32 920167782, %v1257
        %v1270 = vor.u32 %v1268, %v1269
        %v1271 = vshll.u32 920167782, %v1256
        %v1272 = vshrl.u32 1326507024, %v1257
        %v1273 = vor.u32 %v1271, %v1272
        %vm1274 = vcmp.lt.s32.totalorder %v1255, 1
        %vm1275 = vcmp.lt.s32.totalorder %v1255, 2
        %vm1276 = vcmp.lt.s32.totalorder %v1255, 3
        %vm1277 = vcmp.lt.s32.totalorder %v1255, 4
        %v1278 = vsel %vm1274, %v1258, %v1261
        %v1279 = vsel %vm1277, %v1267, 2102212464
        %v1280 = vsel %vm1276, %v1264, %v1279
        %v1281 = vsel %vm1275, %v1278, %v1280
        %v1282 = vsel %vm1274, %v1261, %v1264
        %v1283 = vsel %vm1277, %v1270, 920167782
        %v1284 = vsel %vm1276, %v1267, %v1283
        %v1285 = vsel %vm1275, %v1282, %v1284
        %v1286 = vsel %vm1274, %v1264, %v1267
        %v1287 = vsel %vm1277, %v1273, 1326507024
        %v1288 = vsel %vm1276, %v1270, %v1287
        %v1289 = vsel %vm1275, %v1286, %v1288
        %v1290 = vshll.u32 %v1250, 8
        %v1291 = vmul.u32.u64.compose %v1290, %v1289
        %v1292 = vextract.low.u32 %v1291
        %v1293 = vextract.high.u32 %v1291
        %v1294 = vmul.u32.u64.compose %v1290, %v1285
        %v1295 = vextract.low.u32 %v1294
        %v1296 = vextract.high.u32 %v1294
        %v1297 = vmul.u32 %v1290, %v1281
        %v1298 = vadd.s32 %v1293, %v1295
        %vm1299 = vc.u32 %v1293, %v1295
        %v1300 = vadd.s32 %v1296, 1
        %v1301 = vsel %vm1299, %v1300, %v1296
        %v1302 = vadd.s32 %v1297, %v1301
        %v1303 = vadd.s32 %v1302, 536870912
        %v1304 = vshrl.u32 %v1303, 30
        %v1305 = vshll.u32 %v1304, 30
        %v1306 = vsub.s32 %v1302, %v1305
        %vm1307 = vcmp.lt.s32.totalorder %v1306, 0
        %v1308 = vsub.s32 0, %v1306
        %v1309 = vsel %vm1307, %v1308, %v1306
        %v1310 = vclz %v1309
        %v1311 = vsub.s32 %v1310, 2
        %vm1312 = vcmp.gt.s32.totalorder 0, %v1311
        %v1313 = vsel %vm1312, 0, %v1311
        %v1314 = vsub.s32 32, %v1313
        %v1315 = vshll.u32 %v1306, %v1313
        %v1316 = vshrl.u32 %v1298, %v1314
        %v1317 = vor.u32 %v1315, %v1316
        %v1318 = vsub.s32 4294967266, %v1313
        %v1319 = vadd.s32 %v1318, 127
        %v1320 = vshll.u32 %v1319, 23
        %v1321 = vor.u32 4788187, %v1320
        %v1322 = vand.u32 2147483647, %v1321
        %v1324 = vcvt.s32.f32 %v1317
        %v1325 = vmul.f32 %v1324, %v1322
        %v1326 = vxor.u32 %v1325, 2147483648
        %v1327 = vsel %vm1244, %v1326, %v1325
        %v1328 = vsub.s32 4, %v1304
        %v1329 = vsel %vm1244, %v1328, %v1304
        %v1330 = vsel %vm1243, %v1236, %v1327
        %v1331 = vsel %vm1243, 0, %v1329
        %v1332 = vcosq.f32.pop %v1330
        %v1333 = vsinq.f32.pop %v1330
        %vm1334 = vweird.f32 %v1236
        %v1335 = vadd.s32 %v1331, 3
        %v1336 = vand.u32 %v1335, 3
        %vm1337 = vcmp.lt.s32.totalorder %v1336, 2
        %vm1338 = vcmp.eq.s32.totalorder %v1336, 0
        %v1339 = vxor.u32 %v1333, 2147483648
        %v1340 = vsel %vm1338, %v1332, %v1339
        %vm1341 = vcmp.eq.s32.totalorder %v1336, 2
        %v1342 = vxor.u32 %v1332, 2147483648
        %v1343 = vsel %vm1341, %v1342, %v1333
        %v1344 = vsel %vm1337, %v1340, %v1343
        %v1345 = vsel %vm1334, nan, %v1344
        %v1347 = vsel %vm498, %v1238, 0
        %v1350 = vsel %vm498, %v1239, 0
        %v1353 = vsel %vm498, %v1240, 0
        %v1356 = vsel %vm498, %v1241, 0
        %1358 = vmatprep.subr.mxu0 0.0
        %1359 = vmatpush1.msra.mxu0 %v1345
        %1360 = vmatprep.subr.mxu0 0.0
        %1361 = vmatpush1.msra.mxu0 0.0
        %1362 = vmatprep.subr.mxu0 0.0
        %1363 = vmatpush1.msra.mxu0 0.0
        %1364 = vmatprep.subr.mxu0 0.0
        %1365 = vmatpush1.msra.mxu0 0.0
        %1366 = vmatprep.subr.mxu0 0.0
        %1367 = vmatpush1.msra.mxu0 0.0
        %1368 = vmatprep.subr.mxu0 0.0
        %1369 = vmatpush1.msra.mxu0 0.0
        %1370 = vmatprep.subr.mxu0 0.0
        %1371 = vmatpush1.msra.mxu0 0.0
        %1372 = vmatprep.subr.mxu0 0.0
        %1373 = vmatpush1.msra.mxu0 0.0
        %1374 = vmatprep.subr.mxu0 0.0
        %1375 = vmatpush1.msra.mxu0 0.0
        %1376 = vmatprep.subr.mxu0 0.0
        %1377 = vmatpush1.msra.mxu0 0.0
        %1378 = vmatprep.subr.mxu0 0.0
        %1379 = vmatpush1.msra.mxu0 0.0
        %1380 = vmatprep.subr.mxu0 0.0
        %1381 = vmatpush1.msra.mxu0 0.0
        %1382 = vmatprep.subr.mxu0 0.0
        %1383 = vmatpush1.msra.mxu0 0.0
        %1384 = vmatprep.subr.mxu0 0.0
        %1385 = vmatpush1.msra.mxu0 0.0
        %1386 = vmatprep.subr.mxu0 0.0
        %1387 = vmatpush1.msra.mxu0 0.0
        %1388 = vmatprep.subr.mxu0 0.0
        %1389 = vmatpush1.msra.mxu0 0.0
        %1390 = vmatprep.subr.mxu0 0.0
        %1391 = vmatpush1.msra.mxu0 0.0
        %1392 = vmatprep.subr.mxu0 0.0
        %1393 = vmatpush1.msra.mxu0 0.0
        %1394 = vmatprep.subr.mxu0 0.0
        %1395 = vmatpush1.msra.mxu0 0.0
        %1396 = vmatprep.subr.mxu0 0.0
        %1397 = vmatpush1.msra.mxu0 0.0
        %1398 = vmatprep.subr.mxu0 0.0
        %1399 = vmatpush1.msra.mxu0 0.0
        %1400 = vmatprep.subr.mxu0 0.0
        %1401 = vmatpush1.msra.mxu0 0.0
        %1402 = vmatprep.subr.mxu0 0.0
        %1403 = vmatpush1.msra.mxu0 0.0
        %1404 = vmatprep.subr.mxu0 0.0
        %1405 = vmatpush1.msra.mxu0 0.0
        %1406 = vmatprep.subr.mxu0 0.0
        %1407 = vmatpush1.msra.mxu0 0.0
        %1408 = vmatprep.subr.mxu0 0.0
        %1409 = vmatpush1.msra.mxu0 0.0
        %1410 = vmatprep.subr.mxu0 0.0
        %1411 = vmatpush1.msra.mxu0 0.0
        %1412 = vmatprep.subr.mxu0 0.0
        %1413 = vmatpush1.msra.mxu0 0.0
        %1414 = vmatprep.subr.mxu0 0.0
        %1415 = vmatpush1.msra.mxu0 0.0
        %1416 = vmatprep.subr.mxu0 0.0
        %1417 = vmatpush1.msra.mxu0 0.0
        %1418 = vmatprep.subr.mxu0 0.0
        %1419 = vmatpush1.msra.mxu0 0.0
        %1420 = vmatprep.subr.mxu0 0.0
        %1421 = vmatpush1.msra.mxu0 0.0
        %1422 = vmatprep.mubr.f32.mxu0 0.0
        %1423 = vmatmul.mubr.f32.gmra.mrb[0].mxu0 %v1347
        %v1424 = vpop.f32.mrb[0].mxu0
        %v1425 = vadd.f32 0.0, %v1424
        %v1426 = vpop.f32.mrb[0].mxu0
        %1427 = vmatprep.mubr.f32.mxu0 0.0
        %1428 = vmatmul.mubr.f32.gmra.mrb[0].mxu0 %v1350
        %v1429 = vpop.f32.mrb[0].mxu0
        %v1430 = vadd.f32 0.0, %v1429
        %v1431 = vpop.f32.mrb[0].mxu0
        %1432 = vmatprep.mubr.f32.mxu0 0.0
        %1433 = vmatmul.mubr.f32.gmra.mrb[0].mxu0 %v1353
        %v1434 = vpop.f32.mrb[0].mxu0
        %v1435 = vadd.f32 0.0, %v1434
        %v1436 = vpop.f32.mrb[0].mxu0
        %1437 = vmatprep.mubr.f32.mxu0 0.0
        %1438 = vmatmul.mubr.f32.gmra.mrb[0].mxu0 %v1356
        %v1439 = vpop.f32.mrb[0].mxu0
        %v1440 = vadd.f32 0.0, %v1439
        %v1441 = vpop.f32.mrb[0].mxu0
        %1442 = vdwg.mxu0
        %v1443 = vadd.f32 %v1228, %v1425
        %v1444 = vadd.f32 %v1229, %v1430
        %v1445 = vadd.f32 %v1230, %v1435
        %v1446 = vadd.f32 %v1231, %v1440
        %s1447 = scalar_lea.vmem %s3, 64
        %v1448 = vld [vmem:[%s1447] sm:$0xff]
        %v1449 = vld [vmem:[%s1447 + $0x8] sm:$0xff]
        %v1450 = vld [vmem:[%s1447 + $0x10] sm:$0xff]
        %v1451 = vld [vmem:[%s1447 + $0x18] sm:$0xff]
        %v1452 = vand.u32 2147483647, %v1236
        %vm1453 = vcmp.le.f32.partialorder %v1452, 0.7853982
        %vm1454 = vcmp.lt.s32.totalorder %v1236, 0
        %v1455 = vand.u32 %v1236, 2139095040
        %v1456 = vshrl.u32 %v1455, 23
        %v1457 = vsub.s32 %v1456, 127
        %v1458 = vand.u32 2147483647, %v1236
        %v1459 = vand.u32 %v1458, 8388607
        %v1460 = vor.u32 %v1459, 8388608
        %v1461 = vsub.s32 0, %v1460
        %v1462 = vadd.s32 %v1457, 1
        %vm1463 = vcmp.gt.s32.totalorder %v1462, 0
        %v1464 = vsel %vm1463, %v1462, 0
        %v1465 = vshrl.u32 %v1464, 5
        %v1466 = vand.u32 %v1464, 31
        %v1467 = vsub.s32 32, %v1466
        %v1468 = vshrl.u32 683565275, %v1467
        %v1469 = vshll.u32 683565275, %v1466
        %v1470 = vshrl.u32 2475754826, %v1467
        %v1471 = vor.u32 %v1469, %v1470
        %v1472 = vshll.u32 2475754826, %v1466
        %v1473 = vshrl.u32 2131351028, %v1467
        %v1474 = vor.u32 %v1472, %v1473
        %v1475 = vshll.u32 2131351028, %v1466
        %v1476 = vshrl.u32 2102212464, %v1467
        %v1477 = vor.u32 %v1475, %v1476
        %v1478 = vshll.u32 2102212464, %v1466
        %v1479 = vshrl.u32 920167782, %v1467
        %v1480 = vor.u32 %v1478, %v1479
        %v1481 = vshll.u32 920167782, %v1466
        %v1482 = vshrl.u32 1326507024, %v1467
        %v1483 = vor.u32 %v1481, %v1482
        %vm1484 = vcmp.lt.s32.totalorder %v1465, 1
        %vm1485 = vcmp.lt.s32.totalorder %v1465, 2
        %vm1486 = vcmp.lt.s32.totalorder %v1465, 3
        %vm1487 = vcmp.lt.s32.totalorder %v1465, 4
        %v1488 = vsel %vm1484, %v1468, %v1471
        %v1489 = vsel %vm1487, %v1477, 2102212464
        %v1490 = vsel %vm1486, %v1474, %v1489
        %v1491 = vsel %vm1485, %v1488, %v1490
        %v1492 = vsel %vm1484, %v1471, %v1474
        %v1493 = vsel %vm1487, %v1480, 920167782
        %v1494 = vsel %vm1486, %v1477, %v1493
        %v1495 = vsel %vm1485, %v1492, %v1494
        %v1496 = vsel %vm1484, %v1474, %v1477
        %v1497 = vsel %vm1487, %v1483, 1326507024
        %v1498 = vsel %vm1486, %v1480, %v1497
        %v1499 = vsel %vm1485, %v1496, %v1498
        %v1500 = vshll.u32 %v1460, 8
        %v1501 = vmul.u32.u64.compose %v1500, %v1499
        %v1502 = vextract.low.u32 %v1501
        %v1503 = vextract.high.u32 %v1501
        %v1504 = vmul.u32.u64.compose %v1500, %v1495
        %v1505 = vextract.low.u32 %v1504
        %v1506 = vextract.high.u32 %v1504
        %v1507 = vmul.u32 %v1500, %v1491
        %v1508 = vadd.s32 %v1503, %v1505
        %vm1509 = vc.u32 %v1503, %v1505
        %v1510 = vadd.s32 %v1506, 1
        %v1511 = vsel %vm1509, %v1510, %v1506
        %v1512 = vadd.s32 %v1507, %v1511
        %v1513 = vadd.s32 %v1512, 536870912
        %v1514 = vshrl.u32 %v1513, 30
        %v1515 = vshll.u32 %v1514, 30
        %v1516 = vsub.s32 %v1512, %v1515
        %vm1517 = vcmp.lt.s32.totalorder %v1516, 0
        %v1518 = vsub.s32 0, %v1516
        %v1519 = vsel %vm1517, %v1518, %v1516
        %v1520 = vclz %v1519
        %v1521 = vsub.s32 %v1520, 2
        %vm1522 = vcmp.gt.s32.totalorder 0, %v1521
        %v1523 = vsel %vm1522, 0, %v1521
        %v1524 = vsub.s32 32, %v1523
        %v1525 = vshll.u32 %v1516, %v1523
        %v1526 = vshrl.u32 %v1508, %v1524
        %v1527 = vor.u32 %v1525, %v1526
        %v1528 = vsub.s32 4294967266, %v1523
        %v1529 = vadd.s32 %v1528, 127
        %v1530 = vshll.u32 %v1529, 23
        %v1531 = vor.u32 4788187, %v1530
        %v1532 = vand.u32 2147483647, %v1531
        %v1534 = vcvt.s32.f32 %v1527
        %v1535 = vmul.f32 %v1534, %v1532
        %v1536 = vxor.u32 %v1535, 2147483648
        %v1537 = vsel %vm1454, %v1536, %v1535
        %v1538 = vsub.s32 4, %v1514
        %v1539 = vsel %vm1454, %v1538, %v1514
        %v1540 = vsel %vm1453, %v1236, %v1537
        %v1541 = vsel %vm1453, 0, %v1539
        %v1542 = vcosq.f32.pop %v1540
        %v1543 = vsinq.f32.pop %v1540
        %vm1544 = vweird.f32 %v1236
        %v1545 = vand.u32 %v1541, 3
        %vm1546 = vcmp.lt.s32.totalorder %v1545, 2
        %vm1547 = vcmp.eq.s32.totalorder %v1545, 0
        %v1548 = vxor.u32 %v1543, 2147483648
        %v1549 = vsel %vm1547, %v1542, %v1548
        %vm1550 = vcmp.eq.s32.totalorder %v1545, 2
        %v1551 = vxor.u32 %v1542, 2147483648
        %v1552 = vsel %vm1550, %v1551, %v1543
        %v1553 = vsel %vm1546, %v1549, %v1552
        %v1554 = vsel %vm1544, nan, %v1553
        %v1556 = vsel %vm498, %v1448, 0
        %v1559 = vsel %vm498, %v1449, 0
        %v1562 = vsel %vm498, %v1450, 0
        %v1565 = vsel %vm498, %v1451, 0
        %1567 = vmatprep.subr.mxu0 0.0
        %1568 = vmatpush1.msra.mxu0 %v1554
        %1569 = vmatprep.subr.mxu0 0.0
        %1570 = vmatpush1.msra.mxu0 0.0
        %1571 = vmatprep.subr.mxu0 0.0
        %1572 = vmatpush1.msra.mxu0 0.0
        %1573 = vmatprep.subr.mxu0 0.0
        %1574 = vmatpush1.msra.mxu0 0.0
        %1575 = vmatprep.subr.mxu0 0.0
        %1576 = vmatpush1.msra.mxu0 0.0
        %1577 = vmatprep.subr.mxu0 0.0
        %1578 = vmatpush1.msra.mxu0 0.0
        %1579 = vmatprep.subr.mxu0 0.0
        %1580 = vmatpush1.msra.mxu0 0.0
        %1581 = vmatprep.subr.mxu0 0.0
        %1582 = vmatpush1.msra.mxu0 0.0
        %1583 = vmatprep.subr.mxu0 0.0
        %1584 = vmatpush1.msra.mxu0 0.0
        %1585 = vmatprep.subr.mxu0 0.0
        %1586 = vmatpush1.msra.mxu0 0.0
        %1587 = vmatprep.subr.mxu0 0.0
        %1588 = vmatpush1.msra.mxu0 0.0
        %1589 = vmatprep.subr.mxu0 0.0
        %1590 = vmatpush1.msra.mxu0 0.0
        %1591 = vmatprep.subr.mxu0 0.0
        %1592 = vmatpush1.msra.mxu0 0.0
        %1593 = vmatprep.subr.mxu0 0.0
        %1594 = vmatpush1.msra.mxu0 0.0
        %1595 = vmatprep.subr.mxu0 0.0
        %1596 = vmatpush1.msra.mxu0 0.0
        %1597 = vmatprep.subr.mxu0 0.0
        %1598 = vmatpush1.msra.mxu0 0.0
        %1599 = vmatprep.subr.mxu0 0.0
        %1600 = vmatpush1.msra.mxu0 0.0
        %1601 = vmatprep.subr.mxu0 0.0
        %1602 = vmatpush1.msra.mxu0 0.0
        %1603 = vmatprep.subr.mxu0 0.0
        %1604 = vmatpush1.msra.mxu0 0.0
        %1605 = vmatprep.subr.mxu0 0.0
        %1606 = vmatpush1.msra.mxu0 0.0
        %1607 = vmatprep.subr.mxu0 0.0
        %1608 = vmatpush1.msra.mxu0 0.0
        %1609 = vmatprep.subr.mxu0 0.0
        %1610 = vmatpush1.msra.mxu0 0.0
        %1611 = vmatprep.subr.mxu0 0.0
        %1612 = vmatpush1.msra.mxu0 0.0
        %1613 = vmatprep.subr.mxu0 0.0
        %1614 = vmatpush1.msra.mxu0 0.0
        %1615 = vmatprep.subr.mxu0 0.0
        %1616 = vmatpush1.msra.mxu0 0.0
        %1617 = vmatprep.subr.mxu0 0.0
        %1618 = vmatpush1.msra.mxu0 0.0
        %1619 = vmatprep.subr.mxu0 0.0
        %1620 = vmatpush1.msra.mxu0 0.0
        %1621 = vmatprep.subr.mxu0 0.0
        %1622 = vmatpush1.msra.mxu0 0.0
        %1623 = vmatprep.subr.mxu0 0.0
        %1624 = vmatpush1.msra.mxu0 0.0
        %1625 = vmatprep.subr.mxu0 0.0
        %1626 = vmatpush1.msra.mxu0 0.0
        %1627 = vmatprep.subr.mxu0 0.0
        %1628 = vmatpush1.msra.mxu0 0.0
        %1629 = vmatprep.subr.mxu0 0.0
        %1630 = vmatpush1.msra.mxu0 0.0
        %1631 = vmatprep.mubr.f32.mxu0 0.0
        %1632 = vmatmul.mubr.f32.gmra.mrb[0].mxu0 %v1556
        %v1633 = vpop.f32.mrb[0].mxu0
        %v1634 = vadd.f32 0.0, %v1633
        %v1635 = vpop.f32.mrb[0].mxu0
        %1636 = vmatprep.mubr.f32.mxu0 0.0
        %1637 = vmatmul.mubr.f32.gmra.mrb[0].mxu0 %v1559
        %v1638 = vpop.f32.mrb[0].mxu0
        %v1639 = vadd.f32 0.0, %v1638
        %v1640 = vpop.f32.mrb[0].mxu0
        %1641 = vmatprep.mubr.f32.mxu0 0.0
        %1642 = vmatmul.mubr.f32.gmra.mrb[0].mxu0 %v1562
        %v1643 = vpop.f32.mrb[0].mxu0
        %v1644 = vadd.f32 0.0, %v1643
        %v1645 = vpop.f32.mrb[0].mxu0
        %1646 = vmatprep.mubr.f32.mxu0 0.0
        %1647 = vmatmul.mubr.f32.gmra.mrb[0].mxu0 %v1565
        %v1648 = vpop.f32.mrb[0].mxu0
        %v1649 = vadd.f32 0.0, %v1648
        %v1650 = vpop.f32.mrb[0].mxu0
        %1651 = vdwg.mxu0
        %v1652 = vadd.f32 %v1443, %v1634
        %v1653 = vadd.f32 %v1444, %v1639
        %v1654 = vadd.f32 %v1445, %v1644
        %v1655 = vadd.f32 %v1446, %v1649
        %1656 = vxpose.xlu0.b32.start [1/16] %v1652, 128
        %1657 = vxpose.xlu0.b32.cont [2/16] %v1653, 128
        %1658 = vxpose.xlu0.b32.cont [3/16] %v1654, 128
        %1659 = vxpose.xlu0.b32.cont [4/16] %v1655, 128
        %1660 = vxpose.xlu0.b32.cont [5/16] 0.0, 128
        %1661 = vxpose.xlu0.b32.cont [6/16] 0.0, 128
        %1662 = vxpose.xlu0.b32.cont [7/16] 0.0, 128
        %1663 = vxpose.xlu0.b32.cont [8/16] 0.0, 128
        %1664 = vxpose.xlu0.b32.cont [9/16] 0.0, 128
        %1665 = vxpose.xlu0.b32.cont [10/16] 0.0, 128
        %1666 = vxpose.xlu0.b32.cont [11/16] 0.0, 128
        %1667 = vxpose.xlu0.b32.cont [12/16] 0.0, 128
        %1668 = vxpose.xlu0.b32.cont [13/16] 0.0, 128
        %1669 = vxpose.xlu0.b32.cont [14/16] 0.0, 128
        %1670 = vxpose.xlu0.b32.cont [15/16] 0.0, 128
        %1671 = vxpose.xlu0.b32.end [16/16] 0.0, 128
        %v1672 = vpop.trf.xlu0
        %v1673 = vpop.trf.xlu0
        %v1674 = vpop.trf.xlu0
        %v1675 = vpop.trf.xlu0
        %v1676 = vpop.trf.xlu0
        %v1677 = vpop.trf.xlu0
        %v1678 = vpop.trf.xlu0
        %v1679 = vpop.trf.xlu0
        %v1680 = vpop.trf.xlu0
        %v1681 = vpop.trf.xlu0
        %v1682 = vpop.trf.xlu0
        %v1683 = vpop.trf.xlu0
        %v1684 = vpop.trf.xlu0
        %v1685 = vpop.trf.xlu0
        %v1686 = vpop.trf.xlu0
        %v1687 = vpop.trf.xlu0
        %vm1688 = vcmask 261120
        %1689 = vst.msk [vmem:[%s238] sm:$0xff] %vm1688, %v1672
        %1690 = vst.msk [vmem:[%s238 + $0x8] sm:$0xff] %vm1688, %v1673
        %1691 = vst.msk [vmem:[%s238 + $0x10] sm:$0xff] %vm1688, %v1674
        %1692 = vst.msk [vmem:[%s238 + $0x18] sm:$0xff] %vm1688, %v1675
        %1693 = vst.msk [vmem:[%s238 + $0x20] sm:$0xff] %vm1688, %v1676
        %1694 = vst.msk [vmem:[%s238 + $0x28] sm:$0xff] %vm1688, %v1677
        %1695 = vst.msk [vmem:[%s238 + $0x30] sm:$0xff] %vm1688, %v1678
        %1696 = vst.msk [vmem:[%s238 + $0x38] sm:$0xff] %vm1688, %v1679
        %1697 = vst.msk [vmem:[%s238 + $0x40] sm:$0xff] %vm1688, %v1680
        %1698 = vst.msk [vmem:[%s238 + $0x48] sm:$0xff] %vm1688, %v1681
        %1699 = vst.msk [vmem:[%s238 + $0x50] sm:$0xff] %vm1688, %v1682
        %1700 = vst.msk [vmem:[%s238 + $0x58] sm:$0xff] %vm1688, %v1683
        %1701 = vst.msk [vmem:[%s238 + $0x60] sm:$0xff] %vm1688, %v1684
        %1702 = vst.msk [vmem:[%s238 + $0x68] sm:$0xff] %vm1688, %v1685
        %1703 = vst.msk [vmem:[%s238 + $0x70] sm:$0xff] %vm1688, %v1686
        %1704 = vst.msk [vmem:[%s238 + $0x78] sm:$0xff] %vm1688, %v1687
        %s1705 = sand.u32 %s156, 1
        %s1706 = sand.u32 %s156, 1
        %s1707 = smul.addr %s1706, 128
        %s1708 = scalar_lea.vmem [#allocation2], %s1707
        // Predicated region
        $region45: #{fourier_point_encoder.1} parent=43 // pred_check
          %p1709 = pneg %p166
        $region46: #{fourier_point_encoder.1} parent=43 // pred_check_branch
          %1711 = sbr.rel (%p1709) target = $region48
        $region47: #{fourier_point_encoder.1} parent=43 // pred_region
          %s1712 = smul.u32 16, %s17
          %s1713 = ssub.s32 25, %s1712
          %p1714 = scmp.lt.s32.totalorder %s1713, 16
          %s1715 = scalar_select %p1714, %s1713, 16
          %s1716 = smul.u32 128, %s1715
          %p1717 = scmp.ne.s32.totalorder 0, %s1716
          %s1718 = smul.addr %s1712, 8
          %s1719 = scalar_lea.vmem %s6, %s1718
          // Predicated region
          $region49: #{fourier_point_encoder.1} parent=47 // pred_check
            %p1720 = pneg %p1717
          $region50: #{fourier_point_encoder.1} parent=47 // pred_check_branch
            %1722 = sbr.rel (%p1720) target = $region52
          $region51: #{fourier_point_encoder.1} parent=47 // pred_region
            // Predicated region
            $region53: #{fourier_point_encoder.1} parent=51 // pred_check
              _
            $region54: #{fourier_point_encoder.1} parent=51 // pred_check_branch
              %1724 = sbr.rel (0) target = $region56
            $region55: #{fourier_point_encoder.1} parent=51 // pred_region
              // Predicated region
              $region75: #{fourier_point_encoder.1} parent=55 // pred_check
                _
              $region76: #{fourier_point_encoder.1} parent=55 // pred_check_branch
                %1803 = sbr.rel (0) target = $region78
              $region77: #{fourier_point_encoder.1} parent=55 // pred_region
                %s1804 = sshrl.u32 %s1715, 4
                // While loop
                $region79: #{fourier_point_encoder.1} parent=77 // loop_pre_header
                  _
                $region80: #{fourier_point_encoder.1} parent=77 // loop_header
                  %s1806 = sphi 0, %s1808
                  %p1807 = scmp.ge.s32.totalorder %s1806, %s1804
                  %s1811 = sphi 0, %s1848
                  %s1812 = sphi %s1708, %s1851
                  %s1813 = sphi %s1719, %s1852
                $region81: #{fourier_point_encoder.1} parent=77 // loop_header_branch
                  %1810 = sbr.rel (%p1807) target = $region85
                $region82: #{fourier_point_encoder.1} parent=77 // loop_body
                  %v1814 = vld [vmem:[%s1812] sm:$0xff]
                  %1815 = vst [vmem:[%s1813] sm:$0xff] %v1814
                  %v1816 = vld [vmem:[%s1812 + $0x8] sm:$0xff]
                  %1817 = vst [vmem:[%s1813 + $0x8] sm:$0xff] %v1816
                  %v1818 = vld [vmem:[%s1812 + $0x10] sm:$0xff]
                  %1819 = vst [vmem:[%s1813 + $0x10] sm:$0xff] %v1818
                  %v1820 = vld [vmem:[%s1812 + $0x18] sm:$0xff]
                  %1821 = vst [vmem:[%s1813 + $0x18] sm:$0xff] %v1820
                  %v1822 = vld [vmem:[%s1812 + $0x20] sm:$0xff]
                  %1823 = vst [vmem:[%s1813 + $0x20] sm:$0xff] %v1822
                  %v1824 = vld [vmem:[%s1812 + $0x28] sm:$0xff]
                  %1825 = vst [vmem:[%s1813 + $0x28] sm:$0xff] %v1824
                  %v1826 = vld [vmem:[%s1812 + $0x30] sm:$0xff]
                  %1827 = vst [vmem:[%s1813 + $0x30] sm:$0xff] %v1826
                  %v1828 = vld [vmem:[%s1812 + $0x38] sm:$0xff]
                  %1829 = vst [vmem:[%s1813 + $0x38] sm:$0xff] %v1828
                  %v1830 = vld [vmem:[%s1812 + $0x40] sm:$0xff]
                  %1831 = vst [vmem:[%s1813 + $0x40] sm:$0xff] %v1830
                  %v1832 = vld [vmem:[%s1812 + $0x48] sm:$0xff]
                  %1833 = vst [vmem:[%s1813 + $0x48] sm:$0xff] %v1832
                  %v1834 = vld [vmem:[%s1812 + $0x50] sm:$0xff]
                  %1835 = vst [vmem:[%s1813 + $0x50] sm:$0xff] %v1834
                  %v1836 = vld [vmem:[%s1812 + $0x58] sm:$0xff]
                  %1837 = vst [vmem:[%s1813 + $0x58] sm:$0xff] %v1836
                  %v1838 = vld [vmem:[%s1812 + $0x60] sm:$0xff]
                  %1839 = vst [vmem:[%s1813 + $0x60] sm:$0xff] %v1838
                  %v1840 = vld [vmem:[%s1812 + $0x68] sm:$0xff]
                  %1841 = vst [vmem:[%s1813 + $0x68] sm:$0xff] %v1840
                  %v1842 = vld [vmem:[%s1812 + $0x70] sm:$0xff]
                  %1843 = vst [vmem:[%s1813 + $0x70] sm:$0xff] %v1842
                  %v1844 = vld [vmem:[%s1812 + $0x78] sm:$0xff]
                  %1845 = vst [vmem:[%s1813 + $0x78] sm:$0xff] %v1844
                  %s1846 = sadd.s32 1, %s1811
                  %p1847 = scmp.ge.s32.totalorder %s1846, %s1804
                  %s1848 = scalar_select %p1847, 0, %s1846
                  %s1849 = smul.u32 %s1848, 128
                  %s1850 = smul.u32 %s1848, 128
                  %s1851 = scalar_lea.vmem %s1708, %s1849 [#allocation2]
                  %s1852 = scalar_lea.vmem %s1719, %s1850
                $region83: #{fourier_point_encoder.1} parent=77 // loop_footer
                  %s1808 = sadd.s32 %s1806, 1
                $region84: #{fourier_point_encoder.1} parent=77 // loop_footer_branch
                  %1805 = sbr.rel target = $region80
                $region85: #{fourier_point_encoder.1} parent=77 // loop_exit
                  _
                %s1853 = sshrl.u32 %s1715, 4
                %s1854 = sand.u32 %s1715, 15
                %s1855 = smul.u32 %s1853, 16
                %s1856 = smul.u32 8, %s1855
                %s1857 = scalar_lea.vmem %s1708, %s1856 [#allocation2]
                %s1858 = smul.u32 8, %s1855
                %s1859 = scalar_lea.vmem %s1719, %s1858
                // While loop
                $region86: #{fourier_point_encoder.1} parent=77 // loop_pre_header
                  _
                $region87: #{fourier_point_encoder.1} parent=77 // loop_header
                  %s1861 = sphi 0, %s1863
                  %p1862 = scmp.ge.s32.totalorder %s1861, %s1854
                  %s1866 = sphi 0, %s1873
                  %s1867 = sphi %s1857, %s1876
                  %s1868 = sphi %s1859, %s1877
                $region88: #{fourier_point_encoder.1} parent=77 // loop_header_branch
                  %1865 = sbr.rel (%p1862) target = $region92
                $region89: #{fourier_point_encoder.1} parent=77 // loop_body
                  %v1869 = vld [vmem:[%s1867] sm:$0xff]
                  %1870 = vst [vmem:[%s1868] sm:$0xff] %v1869
                  %s1871 = sadd.s32 1, %s1866
                  %p1872 = scmp.ge.s32.totalorder %s1871, %s1854
                  %s1873 = scalar_select %p1872, 0, %s1871
                  %s1874 = smul.u32 %s1873, 8
                  %s1875 = smul.u32 %s1873, 8
                  %s1876 = scalar_lea.vmem %s1857, %s1874 [#allocation2]
                  %s1877 = scalar_lea.vmem %s1859, %s1875
                $region90: #{fourier_point_encoder.1} parent=77 // loop_footer
                  %s1863 = sadd.s32 %s1861, 1
                $region91: #{fourier_point_encoder.1} parent=77 // loop_footer_branch
                  %1860 = sbr.rel target = $region87
                $region92: #{fourier_point_encoder.1} parent=77 // loop_exit
                  _
              $region78: #{fourier_point_encoder.1} parent=55 // pred_fallthru
                _
              // Predicated region
              $region93: #{fourier_point_encoder.1} parent=55 // pred_check
                _
              $region94: #{fourier_point_encoder.1} parent=55 // pred_check_branch
                %1879 = sbr.rel target = $region96
              $region95: #{fourier_point_encoder.1} parent=55 // pred_region
                _
              $region96: #{fourier_point_encoder.1} parent=55 // pred_fallthru
                _
            $region56: #{fourier_point_encoder.1} parent=51 // pred_fallthru
              _
            // Predicated region
            $region57: #{fourier_point_encoder.1} parent=51 // pred_check
              _
            $region58: #{fourier_point_encoder.1} parent=51 // pred_check_branch
              %1726 = sbr.rel target = $region60
            $region59: #{fourier_point_encoder.1} parent=51 // pred_region
              %s1728 = sshrl.u32 %s1715, 4
              // While loop
              $region61: #{fourier_point_encoder.1} parent=59 // loop_pre_header
                _
              $region62: #{fourier_point_encoder.1} parent=59 // loop_header
                %s1730 = sphi 0, %s1732
                %p1731 = scmp.ge.s32.totalorder %s1730, %s1728
                %s1735 = sphi 0, %s1772
                %s1736 = sphi %s1708, %s1775
                %s1737 = sphi %s1719, %s1776
              $region63: #{fourier_point_encoder.1} parent=59 // loop_header_branch
                %1734 = sbr.rel (%p1731) target = $region67
              $region64: #{fourier_point_encoder.1} parent=59 // loop_body
                %v1738 = vld [vmem:[%s1736] sm:$0xff]
                %1739 = vst [vmem:[%s1737] sm:$0xff] %v1738
                %v1740 = vld [vmem:[%s1736 + $0x8] sm:$0xff]
                %1741 = vst [vmem:[%s1737 + $0x8] sm:$0xff] %v1740
                %v1742 = vld [vmem:[%s1736 + $0x10] sm:$0xff]
                %1743 = vst [vmem:[%s1737 + $0x10] sm:$0xff] %v1742
                %v1744 = vld [vmem:[%s1736 + $0x18] sm:$0xff]
                %1745 = vst [vmem:[%s1737 + $0x18] sm:$0xff] %v1744
                %v1746 = vld [vmem:[%s1736 + $0x20] sm:$0xff]
                %1747 = vst [vmem:[%s1737 + $0x20] sm:$0xff] %v1746
                %v1748 = vld [vmem:[%s1736 + $0x28] sm:$0xff]
                %1749 = vst [vmem:[%s1737 + $0x28] sm:$0xff] %v1748
                %v1750 = vld [vmem:[%s1736 + $0x30] sm:$0xff]
                %1751 = vst [vmem:[%s1737 + $0x30] sm:$0xff] %v1750
                %v1752 = vld [vmem:[%s1736 + $0x38] sm:$0xff]
                %1753 = vst [vmem:[%s1737 + $0x38] sm:$0xff] %v1752
                %v1754 = vld [vmem:[%s1736 + $0x40] sm:$0xff]
                %1755 = vst [vmem:[%s1737 + $0x40] sm:$0xff] %v1754
                %v1756 = vld [vmem:[%s1736 + $0x48] sm:$0xff]
                %1757 = vst [vmem:[%s1737 + $0x48] sm:$0xff] %v1756
                %v1758 = vld [vmem:[%s1736 + $0x50] sm:$0xff]
                %1759 = vst [vmem:[%s1737 + $0x50] sm:$0xff] %v1758
                %v1760 = vld [vmem:[%s1736 + $0x58] sm:$0xff]
                %1761 = vst [vmem:[%s1737 + $0x58] sm:$0xff] %v1760
                %v1762 = vld [vmem:[%s1736 + $0x60] sm:$0xff]
                %1763 = vst [vmem:[%s1737 + $0x60] sm:$0xff] %v1762
                %v1764 = vld [vmem:[%s1736 + $0x68] sm:$0xff]
                %1765 = vst [vmem:[%s1737 + $0x68] sm:$0xff] %v1764
                %v1766 = vld [vmem:[%s1736 + $0x70] sm:$0xff]
                %1767 = vst [vmem:[%s1737 + $0x70] sm:$0xff] %v1766
                %v1768 = vld [vmem:[%s1736 + $0x78] sm:$0xff]
                %1769 = vst [vmem:[%s1737 + $0x78] sm:$0xff] %v1768
                %s1770 = sadd.s32 1, %s1735
                %p1771 = scmp.ge.s32.totalorder %s1770, %s1728
                %s1772 = scalar_select %p1771, 0, %s1770
                %s1773 = smul.u32 %s1772, 128
                %s1774 = smul.u32 %s1772, 128
                %s1775 = scalar_lea.vmem %s1708, %s1773 [#allocation2]
                %s1776 = scalar_lea.vmem %s1719, %s1774
              $region65: #{fourier_point_encoder.1} parent=59 // loop_footer
                %s1732 = sadd.s32 %s1730, 1
              $region66: #{fourier_point_encoder.1} parent=59 // loop_footer_branch
                %1729 = sbr.rel target = $region62
              $region67: #{fourier_point_encoder.1} parent=59 // loop_exit
                _
              %s1777 = sshrl.u32 %s1715, 4
              %s1778 = sand.u32 %s1715, 15
              %s1779 = smul.u32 %s1777, 16
              %s1780 = smul.u32 8, %s1779
              %s1781 = scalar_lea.vmem %s1708, %s1780 [#allocation2]
              %s1782 = smul.u32 8, %s1779
              %s1783 = scalar_lea.vmem %s1719, %s1782
              // While loop
              $region68: #{fourier_point_encoder.1} parent=59 // loop_pre_header
                _
              $region69: #{fourier_point_encoder.1} parent=59 // loop_header
                %s1785 = sphi 0, %s1787
                %p1786 = scmp.ge.s32.totalorder %s1785, %s1778
                %s1790 = sphi 0, %s1797
                %s1791 = sphi %s1781, %s1800
                %s1792 = sphi %s1783, %s1801
              $region70: #{fourier_point_encoder.1} parent=59 // loop_header_branch
                %1789 = sbr.rel (%p1786) target = $region74
              $region71: #{fourier_point_encoder.1} parent=59 // loop_body
                %v1793 = vld [vmem:[%s1791] sm:$0xff]
                %1794 = vst [vmem:[%s1792] sm:$0xff] %v1793
                %s1795 = sadd.s32 1, %s1790
                %p1796 = scmp.ge.s32.totalorder %s1795, %s1778
                %s1797 = scalar_select %p1796, 0, %s1795
                %s1798 = smul.u32 %s1797, 8
                %s1799 = smul.u32 %s1797, 8
                %s1800 = scalar_lea.vmem %s1781, %s1798 [#allocation2]
                %s1801 = scalar_lea.vmem %s1783, %s1799
              $region72: #{fourier_point_encoder.1} parent=59 // loop_footer
                %s1787 = sadd.s32 %s1785, 1
              $region73: #{fourier_point_encoder.1} parent=59 // loop_footer_branch
                %1784 = sbr.rel target = $region69
              $region74: #{fourier_point_encoder.1} parent=59 // loop_exit
                _
            $region60: #{fourier_point_encoder.1} parent=51 // pred_fallthru
              _
          $region52: #{fourier_point_encoder.1} parent=47 // pred_fallthru
            _
          %1880 = vnop
        $region48: #{fourier_point_encoder.1} parent=43 // pred_fallthru
          _
      $region44: #{fourier_point_encoder.1} parent=5 // pred_fallthru
        _
      %p1881 = scmp.le.s32.totalorder 2, %s12
      // Predicated region
      $region97: #{fourier_point_encoder.1} parent=5 // pred_check
        %p1882 = pneg %p1881
      $region98: #{fourier_point_encoder.1} parent=5 // pred_check_branch
        %1884 = sbr.rel (%p1882) target = $region100
      $region99: #{fourier_point_encoder.1} parent=5 // pred_region
        %s1885 = ssub.s32 %s12, 2
        // Predicated region
        $region101: #{fourier_point_encoder.1} parent=99 // pred_check
          %p1886 = pneg %p172
        $region102: #{fourier_point_encoder.1} parent=99 // pred_check_branch
          %1888 = sbr.rel (%p1886) target = $region104
        $region103: #{fourier_point_encoder.1} parent=99 // pred_region
          %s1889 = sand.u32 %s157, 1
          %s1890 = sand.u32 %s157, 1
          %s1891 = smul.addr %s1890, 128
          %s1892 = scalar_lea.vmem [#allocation2], %s1891
        $region104: #{fourier_point_encoder.1} parent=99 // pred_fallthru
          _
      $region100: #{fourier_point_encoder.1} parent=5 // pred_fallthru
        _
    $region6: #{fourier_point_encoder.1} parent=1 // loop_footer
      %s16 = sadd.s32 1, %s12
    $region7: #{fourier_point_encoder.1} parent=1 // loop_footer_branch
      %11 = sbr.rel target = $region3
    $region8: #{fourier_point_encoder.1} parent=1 // loop_exit
      _

</llo_original>
